<compile_context>
chip_gen: v6e
topology: v6e:2x2x1
jax: 0.10.0
libtpu: 0.0.40
codegen_flags: <defaults>
</compile_context>

<pallas_src>
import functools

import jax
import jax.numpy as jnp
from jax import lax
from jax.experimental import pallas as pl
from jax.experimental.pallas import tpu as pltpu

LANE = 128
NEG_BIAS = -1e30      # bias for padded fc3 columns -> exp() underflows to exactly 0 in log_softmax

K1_PAD = 128          # conv1 patch K: 5*5*3 = 75  -> 128
M1_PAD = 208          # conv1 pooled positions: 14*14 = 196 -> 208 (multiple of 16 for bf16)
K2_PAD = 256          # conv2 patch K: 5*5*6 = 150 -> 256
M2_PAD = 32           # conv2 pooled positions: 5*5 = 25 -> 32
FC_IN_PAD = 512       # fc1 input: 400 -> 512


# ----------------------------- Pallas kernels ------------------------------ #

def _conv_relu_pool_kernel(p_ref, w_ref, b_ref, o_ref):
    """Fused conv (im2col matmul) + bias + ReLU + 2x2 maxpool for NB images.

    p_ref: (NB, 4, M, Kp) bf16  -- 4 pool-quadrant patch matrices per image (M = pooled H*W)
    w_ref: (Kp, 128)      bf16  -- padded conv weight, rows ordered (ki, kj, cin)
    b_ref: (1, 128)       f32   -- padded bias
    o_ref: (NB, M, 128)   bf16  -- relu(max_q(p_q @ w) + b) == maxpool2x2(relu(conv(x)+b))
    """
    nb, q, m, kp = p_ref.shape
    n = w_ref.shape[1]
    # Single MXU push: fold NB and the quadrant axis into M (layout-free: m % 16 == 0).
    p = p_ref[...].reshape(nb * q * m, kp)
    s = jnp.dot(p, w_ref[...], preferred_element_type=jnp.float32)
    s = s.reshape(nb, q, m, n)
    # 2x2 maxpool == max over the 4 quadrant conv outputs (pure VPU, hides under MXU/DMA).
    s = jnp.maximum(jnp.maximum(s[:, 0], s[:, 1]), jnp.maximum(s[:, 2], s[:, 3]))
    o_ref[...] = jnp.maximum(s + b_ref[...], 0.0).astype(o_ref.dtype)


def _fc_chain_kernel(x_ref, w1_ref, b1_ref, w2_ref, b2_ref, w3_ref, b3_ref, o_ref):
    """Fused fc1->relu->fc2->relu->fc3->log_softmax; all weights (~0.4 MB) VMEM-resident.

    bf16 operands, f32 accumulation; log_softmax in f32.
    """
    h = jnp.dot(x_ref[...], w1_ref[...], preferred_element_type=jnp.float32) + b1_ref[...]
    h = jnp.maximum(h, 0.0).astype(jnp.bfloat16)
    h = jnp.dot(h, w2_ref[...], preferred_element_type=jnp.float32) + b2_ref[...]
    h = jnp.maximum(h, 0.0).astype(jnp.bfloat16)
    y = jnp.dot(h, w3_ref[...], preferred_element_type=jnp.float32) + b3_ref[...]
    m = jnp.max(y, axis=-1, keepdims=True)
    s = y - m
    lse = jnp.log(jnp.sum(jnp.exp(s), axis=-1, keepdims=True))
    o_ref[...] = s - lse


# ------------------------------ Pallas wrappers ----------------------------- #

def _pick_nb(batch, cap):
    """Images per conv grid step: large (amortize ~0.35us/step) but keep grid >= 2 when B >= 2
    so v7x megacore sharding has work for both TensorCores; cap keeps double-buffered blocks
    inside the default scoped-VMEM budget on all of v5e/v6e/v7x."""
    if batch >= 2 * cap:
        return cap
    return max(1, batch // 2)


def conv_relu_pool(patches, w, b, nb):
    """patches: (B, 4, M, Kp) bf16; w: (Kp, 128) bf16; b: (1, 128) f32 -> (B, M, 128) bf16."""
    B, Q, M, Kp = patches.shape
    Kp2, N = w.shape
    assert Q == 4 and Kp == Kp2 and b.shape == (1, N)
    return pl.pallas_call(
        _conv_relu_pool_kernel,
        out_shape=jax.ShapeDtypeStruct((B, M, N), jnp.bfloat16),
        grid=(pl.cdiv(B, nb),),
        in_specs=[
            pl.BlockSpec((nb, Q, M, Kp), lambda i: (i, 0, 0, 0)),
            pl.BlockSpec((Kp, N), lambda i: (0, 0)),
            pl.BlockSpec((1, N), lambda i: (0, 0)),
        ],
        out_specs=pl.BlockSpec((nb, M, N), lambda i: (i, 0, 0)),
        compiler_params=pltpu.CompilerParams(dimension_semantics=("parallel",)),
    )(patches, w, b)


def fc_chain(x, w1, b1, w2, b2, w3, b3):
    """x: (B, 512) bf16 padded (order m*16+c); returns (B, 128) f32 padded log-probs."""
    B, K = x.shape
    N = w3.shape[1]
    TB = min(B, 128)   # fixed tile <= 128: no vreg spills, pipelined/megacore-shardable grid
    return pl.pallas_call(
        _fc_chain_kernel,
        out_shape=jax.ShapeDtypeStruct((B, N), jnp.float32),
        grid=(pl.cdiv(B, TB),),
        in_specs=[
            pl.BlockSpec((TB, K), lambda i: (i, 0)),
            pl.BlockSpec(w1.shape, lambda i: (0, 0)),
            pl.BlockSpec(b1.shape, lambda i: (0, 0)),
            pl.BlockSpec(w2.shape, lambda i: (0, 0)),
            pl.BlockSpec(b2.shape, lambda i: (0, 0)),
            pl.BlockSpec(w3.shape, lambda i: (0, 0)),
            pl.BlockSpec(b3.shape, lambda i: (0, 0)),
        ],
        out_specs=pl.BlockSpec((TB, N), lambda i: (i, 0)),
        compiler_params=pltpu.CompilerParams(dimension_semantics=("parallel",)),
    )(x, w1, b1, w2, b2, w3, b3)


# ------------------------------- XLA glue ----------------------------------- #

def _quad_patches(x_nhwc, k, k_pad, m_pad):
    """Pool-quadrant im2col in bf16: patches for the 4 interleaved (stride-2) output grids.

    Returns (B, 4, m_pad, k_pad) bf16 with patch element order (ki, kj, cin), zero padded.
    Quadrant (di, dj), pooled position (i, j) corresponds to conv output (2i+di, 2j+dj), so the
    max over quadrants equals a 2x2/stride-2 maxpool of the conv output (ReLU/bias commute).
    """
    B, H, W, C = x_nhwc.shape
    PH, PW = (H - k + 1) // 2, (W - k + 1) // 2
    quads = []
    for di in range(2):
        for dj in range(2):
            cols = []
            for ki in range(k):
                for kj in range(k):
                    cols.append(x_nhwc[:, di + ki: di + ki + 2 * PH: 2,
                                       dj + kj: dj + kj + 2 * PW: 2, :])
            p = jnp.stack(cols, axis=3).reshape(B, PH * PW, k * k * C)
            quads.append(p)
    patches = jnp.stack(quads, axis=1)                     # (B, 4, M, K)
    M, K = PH * PW, k * k * C
    patches = jnp.pad(patches, ((0, 0), (0, 0), (0, m_pad - M), (0, k_pad - K)))
    return patches.astype(jnp.bfloat16), (PH, PW)


def _pad2d(a, rows, cols, value=0.0):
    return jnp.pad(a, ((0, rows - a.shape[0]), (0, cols - a.shape[1])), constant_values=value)


def prepare_params(params):
    """One-time (outside jit) conversion of PyTorch-layout params to padded bf16 (K, N) layouts."""
    def conv_w(w, k_pad):
        cout, cin, kh, kw = w.shape
        m = jnp.transpose(w, (2, 3, 1, 0)).reshape(kh * kw * cin, cout)   # rows = (ki, kj, ci)
        return _pad2d(m, k_pad, LANE).astype(jnp.bfloat16)

    dim_out = params["fc3_b"].shape[0]
    assert dim_out <= LANE

    # Fold the NCHW flatten (x.view(-1, 400), feature = c*25 + m) into fc1_w: permute rows to the
    # kernel's activation order (m*16 + c) so no runtime transpose of activations is needed.
    w1t = params["fc1_w"].T.reshape(16, 25, -1)            # [c, m, 120]
    w1t = jnp.transpose(w1t, (1, 0, 2)).reshape(400, -1)   # [m*16 + c, 120]

    return {
        "c1_w": conv_w(params["conv1_w"], K1_PAD),                           # (128, 128) bf16
        "c1_b": _pad2d(params["conv1_b"][None, :], 1, LANE),                 # (1, 128) f32
        "c2_w": conv_w(params["conv2_w"], K2_PAD),                           # (256, 128) bf16
        "c2_b": _pad2d(params["conv2_b"][None, :], 1, LANE),
        "fc1_w": _pad2d(w1t, FC_IN_PAD, LANE).astype(jnp.bfloat16),          # (512, 128) bf16
        "fc1_b": _pad2d(params["fc1_b"][None, :], 1, LANE),
        "fc2_w": _pad2d(params["fc2_w"].T, LANE, LANE).astype(jnp.bfloat16),
        "fc2_b": _pad2d(params["fc2_b"][None, :], 1, LANE),
        "fc3_w": _pad2d(params["fc3_w"].T, LANE, LANE).astype(jnp.bfloat16),
        "fc3_b": _pad2d(params["fc3_b"][None, :], 1, LANE, value=NEG_BIAS),
    }


def cnn_forward(x_nchw, p, *, dim_out):
    """Forward pass of CNNModel. x_nchw: (B, 3, 32, 32) f32. Returns (B, dim_out) f32 log-probs."""
    B = x_nchw.shape[0]
    x = jnp.transpose(x_nchw, (0, 2, 3, 1))                                 # NHWC (B,32,32,3)

    # conv1 + relu + pool (fused kernel, NB images per grid step)
    pat1, (ph1, pw1) = _quad_patches(x, 5, K1_PAD, M1_PAD)                  # (B,4,208,128) bf16
    y1 = conv_relu_pool(pat1, p["c1_w"], p["c1_b"], _pick_nb(B, 8))         # (B,208,128)  bf16
    y1 = y1[:, :ph1 * pw1, :6].reshape(B, ph1, pw1, 6)                      # (B,14,14,6)

    # conv2 + relu + pool (fused kernel)
    pat2, (ph2, pw2) = _quad_patches(y1, 5, K2_PAD, M2_PAD)                 # (B,4,32,256) bf16
    y2 = conv_relu_pool(pat2, p["c2_w"], p["c2_b"], _pick_nb(B, 32))        # (B,32,128)   bf16

    # Flatten (position-major, channel-minor -> matches permuted fc1_w), pad to lane-dense 512.
    flat = y2[:, :ph2 * pw2, :16].reshape(B, 25 * 16)                       # (B,400) bf16
    flat = jnp.pad(flat, ((0, 0), (0, FC_IN_PAD - 25 * 16)))                # (B,512)

    # fc1 -> relu -> fc2 -> relu -> fc3 -> log_softmax (one fused kernel)
    out = fc_chain(flat, p["fc1_w"], p["fc1_b"], p["fc2_w"], p["fc2_b"],
                   p["fc3_w"], p["fc3_b"])                                  # (B,128) f32
    return out[:, :dim_out]


# ------------------------- reference / params / main ------------------------ #

def reference_forward(x_nchw, params):
    """Pure-XLA f32 reference (same math as the PyTorch module)."""
    x = jnp.transpose(x_nchw, (0, 2, 3, 1))

    def conv_relu(x, w, b):
        y = lax.conv_general_dilated(
            x, jnp.transpose(w, (2, 3, 1, 0)), (1, 1), "VALID",
            dimension_numbers=("NHWC", "HWIO", "NHWC"))
        return jnp.maximum(y + b, 0.0)

    def pool(x):
        return lax.reduce_window(x, -jnp.inf, lax.max, (1, 2, 2, 1), (1, 2, 2, 1), "VALID")

    y = pool(conv_relu(x, params["conv1_w"], params["conv1_b"]))
    y = pool(conv_relu(y, params["conv2_w"], params["conv2_b"]))
    flat = jnp.transpose(y, (0, 3, 1, 2)).reshape(x.shape[0], 16 * 5 * 5)
    h = jnp.maximum(flat @ params["fc1_w"].T + params["fc1_b"], 0.0)
    h = jnp.maximum(h @ params["fc2_w"].T + params["fc2_b"], 0.0)
    logits = h @ params["fc3_w"].T + params["fc3_b"]
    return jax.nn.log_softmax(logits, axis=-1)


def init_params(key, dim_out):
    ks = jax.random.split(key, 10)
    s = 0.1
    return {
        "conv1_w": s * jax.random.normal(ks[0], (6, 3, 5, 5), jnp.float32),
        "conv1_b": s * jax.random.normal(ks[1], (6,), jnp.float32),
        "conv2_w": s * jax.random.normal(ks[2], (16, 6, 5, 5), jnp.float32),
        "conv2_b": s * jax.random.normal(ks[3], (16,), jnp.float32),
        "fc1_w": s * jax.random.normal(ks[4], (120, 16 * 5 * 5), jnp.float32),
        "fc1_b": s * jax.random.normal(ks[5], (120,), jnp.float32),
        "fc2_w": s * jax.random.normal(ks[6], (84, 120), jnp.float32),
        "fc2_b": s * jax.random.normal(ks[7], (84,), jnp.float32),
        "fc3_w": s * jax.random.normal(ks[8], (dim_out, 84), jnp.float32),
        "fc3_b": s * jax.random.normal(ks[9], (dim_out,), jnp.float32),
    }


if __name__ == "__main__":
    dim_out = 10
    batch = 2

    key = jax.random.PRNGKey(0)
    k_x, k_p = jax.random.split(key)
    x = jax.random.normal(k_x, (batch, 3, 32, 32), jnp.float32)   # NCHW, like PyTorch
    params = init_params(k_p, dim_out)
    prepped = prepare_params(params)                              # one-time, outside jit

    forward = jax.jit(functools.partial(cnn_forward, dim_out=dim_out))
    logp = forward(x, prepped)
    jax.block_until_ready(logp)

    assert logp.shape == (batch, dim_out)
    # Log-probabilities: each row should (approximately) exp-sum to 1.
    row_sums = jnp.exp(logp).sum(axis=1)
    assert bool(jnp.all(jnp.abs(row_sums - 1.0) < 1e-3))

    # Numerical parity with a pure-XLA f32 reference (tolerance loosened for bf16 operands).
    ref = jax.jit(reference_forward)(x, params)
    max_err = float(jnp.max(jnp.abs(logp - ref)))
    assert bool(jnp.allclose(logp, ref, atol=1e-1, rtol=5e-2)), max_err

    print("KERNEL_OK")
</pallas_src>

<mosaic_0001>
module attributes {stable_mosaic.version = 11 : i64} {
  func.func @_conv_relu_pool_kernel(%arg0: i32, %arg1: memref<1x4x208x128xbf16, #tpu.memory_space<vmem>>, %arg2: memref<128x128xbf16, #tpu.memory_space<vmem>>, %arg3: memref<1x128xf32, #tpu.memory_space<vmem>>, %arg4: memref<1x208x128xbf16, #tpu.memory_space<vmem>>) attributes {dimension_semantics = [#tpu.dimension_semantics<parallel>], iteration_bounds = array<i64: 2>, scalar_prefetch = 0 : i64, scratch_operands = 0 : i64, tpu.core_type = #tpu.core_type<tc>, window_params = [{transform_indices = @transform_0, window_bounds = array<i64: 1, 4, 208, 128>}, {pipeline_mode = #tpu.pipeline_mode<synchronous>, transform_indices = @transform_1, window_bounds = array<i64: 128, 128>}, {pipeline_mode = #tpu.pipeline_mode<synchronous>, transform_indices = @transform_2, window_bounds = array<i64: 1, 128>}, {transform_indices = @transform_3, window_bounds = array<i64: 1, 208, 128>}]} {
    %c0 = arith.constant 0 : index
    %c0_0 = arith.constant 0 : index
    %c0_1 = arith.constant 0 : index
    %c0_2 = arith.constant 0 : index
    %0 = vector.load %arg1[%c0, %c0_0, %c0_1, %c0_2] : memref<1x4x208x128xbf16, #tpu.memory_space<vmem>>, vector<1x4x208x128xbf16>
    %1 = vector.shape_cast %0 : vector<1x4x208x128xbf16> to vector<832x128xbf16>
    %c0_3 = arith.constant 0 : index
    %c0_4 = arith.constant 0 : index
    %2 = vector.load %arg2[%c0_3, %c0_4] : memref<128x128xbf16, #tpu.memory_space<vmem>>, vector<128x128xbf16>
    %cst = arith.constant dense<0.000000e+00> : vector<832x128xf32>
    %3 = tpu.matmul %1, %2, %cst {dimension_numbers = #tpu.dot_dimension_numbers<[1], [0], [0], [1], [0, 0, 1, 1], [], []>} : vector<832x128xbf16>, vector<128x128xbf16>, vector<832x128xf32> -> vector<832x128xf32>
    %4 = vector.shape_cast %3 : vector<832x128xf32> to vector<1x4x208x128xf32>
    %5 = vector.extract_strided_slice %4 {offsets = [0, 0, 0, 0], sizes = [1, 1, 208, 128], strides = [1, 1, 1, 1]} : vector<1x4x208x128xf32> to vector<1x1x208x128xf32>
    %6 = vector.shape_cast %5 : vector<1x1x208x128xf32> to vector<1x208x128xf32>
    %7 = vector.extract_strided_slice %4 {offsets = [0, 1, 0, 0], sizes = [1, 1, 208, 128], strides = [1, 1, 1, 1]} : vector<1x4x208x128xf32> to vector<1x1x208x128xf32>
    %8 = vector.shape_cast %7 : vector<1x1x208x128xf32> to vector<1x208x128xf32>
    %9 = arith.maximumf %6, %8 : vector<1x208x128xf32>
    %10 = vector.extract_strided_slice %4 {offsets = [0, 2, 0, 0], sizes = [1, 1, 208, 128], strides = [1, 1, 1, 1]} : vector<1x4x208x128xf32> to vector<1x1x208x128xf32>
    %11 = vector.shape_cast %10 : vector<1x1x208x128xf32> to vector<1x208x128xf32>
    %12 = vector.extract_strided_slice %4 {offsets = [0, 3, 0, 0], sizes = [1, 1, 208, 128], strides = [1, 1, 1, 1]} : vector<1x4x208x128xf32> to vector<1x1x208x128xf32>
    %13 = vector.shape_cast %12 : vector<1x1x208x128xf32> to vector<1x208x128xf32>
    %14 = arith.maximumf %11, %13 : vector<1x208x128xf32>
    %15 = arith.maximumf %9, %14 : vector<1x208x128xf32>
    %c0_5 = arith.constant 0 : index
    %c0_6 = arith.constant 0 : index
    %16 = vector.load %arg3[%c0_5, %c0_6] : memref<1x128xf32, #tpu.memory_space<vmem>>, vector<1x128xf32>
    %17 = vector.shape_cast %16 : vector<1x128xf32> to vector<1x1x128xf32>
    %18 = vector.broadcast %17 : vector<1x1x128xf32> to vector<1x208x128xf32>
    %19 = arith.addf %15, %18 : vector<1x208x128xf32>
    %cst_7 = arith.constant 0.000000e+00 : f32
    %20 = vector.broadcast %cst_7 : f32 to vector<1x208x128xf32>
    %21 = arith.maximumf %19, %20 : vector<1x208x128xf32>
    %22 = arith.truncf %21 : vector<1x208x128xf32> to vector<1x208x128xbf16>
    %c0_8 = arith.constant 0 : index
    %c0_9 = arith.constant 0 : index
    %c0_10 = arith.constant 0 : index
    %23 = vector.load %arg4[%c0_8, %c0_9, %c0_10] : memref<1x208x128xbf16, #tpu.memory_space<vmem>>, vector<1x208x128xbf16>
    tpu.vector_store %arg4[%c0_8, %c0_9, %c0_10], %22 {strides = array<i32>} : memref<1x208x128xbf16, #tpu.memory_space<vmem>>, vector<1x208x128xbf16>,
    return
  }
  func.func @transform_0(%arg0: i32) -> (i32, i32, i32, i32) {
    %c0_i32 = arith.constant 0 : i32
    %c0_i32_0 = arith.constant 0 : i32
    %c0_i32_1 = arith.constant 0 : i32
    %c0_i32_2 = arith.constant 0 : i32
    return %arg0, %c0_i32, %c0_i32_0, %c0_i32_1 : i32, i32, i32, i32
  }
  func.func @transform_1(%arg0: i32) -> (i32, i32) {
    %c0_i32 = arith.constant 0 : i32
    %c0_i32_0 = arith.constant 0 : i32
    %c0_i32_1 = arith.constant 0 : i32
    return %c0_i32, %c0_i32_0 : i32, i32
  }
  func.func @transform_2(%arg0: i32) -> (i32, i32) {
    %c0_i32 = arith.constant 0 : i32
    %c0_i32_0 = arith.constant 0 : i32
    %c0_i32_1 = arith.constant 0 : i32
    return %c0_i32, %c0_i32_0 : i32, i32
  }
  func.func @transform_3(%arg0: i32) -> (i32, i32, i32) {
    %c0_i32 = arith.constant 0 : i32
    %c0_i32_0 = arith.constant 0 : i32
    %c0_i32_1 = arith.constant 0 : i32
    return %arg0, %c0_i32, %c0_i32_0 : i32, i32, i32
  }
}

module attributes {stable_mosaic.version = 11 : i64} {
  func.func @_conv_relu_pool_kernel(%arg0: i32, %arg1: memref<1x4x32x256xbf16, #tpu.memory_space<vmem>>, %arg2: memref<256x128xbf16, #tpu.memory_space<vmem>>, %arg3: memref<1x128xf32, #tpu.memory_space<vmem>>, %arg4: memref<1x32x128xbf16, #tpu.memory_space<vmem>>) attributes {dimension_semantics = [#tpu.dimension_semantics<parallel>], iteration_bounds = array<i64: 2>, scalar_prefetch = 0 : i64, scratch_operands = 0 : i64, tpu.core_type = #tpu.core_type<tc>, window_params = [{transform_indices = @transform_0, window_bounds = array<i64: 1, 4, 32, 256>}, {pipeline_mode = #tpu.pipeline_mode<synchronous>, transform_indices = @transform_1, window_bounds = array<i64: 256, 128>}, {pipeline_mode = #tpu.pipeline_mode<synchronous>, transform_indices = @transform_2, window_bounds = array<i64: 1, 128>}, {transform_indices = @transform_3, window_bounds = array<i64: 1, 32, 128>}]} {
    %c0 = arith.constant 0 : index
    %c0_0 = arith.constant 0 : index
    %c0_1 = arith.constant 0 : index
    %c0_2 = arith.constant 0 : index
    %0 = vector.load %arg1[%c0, %c0_0, %c0_1, %c0_2] : memref<1x4x32x256xbf16, #tpu.memory_space<vmem>>, vector<1x4x32x256xbf16>
    %1 = vector.shape_cast %0 : vector<1x4x32x256xbf16> to vector<128x256xbf16>
    %c0_3 = arith.constant 0 : index
    %c0_4 = arith.constant 0 : index
    %2 = vector.load %arg2[%c0_3, %c0_4] : memref<256x128xbf16, #tpu.memory_space<vmem>>, vector<256x128xbf16>
    %cst = arith.constant dense<0.000000e+00> : vector<128x128xf32>
    %3 = tpu.matmul %1, %2, %cst {dimension_numbers = #tpu.dot_dimension_numbers<[1], [0], [0], [1], [0, 0, 1, 1], [], []>} : vector<128x256xbf16>, vector<256x128xbf16>, vector<128x128xf32> -> vector<128x128xf32>
    %4 = vector.shape_cast %3 : vector<128x128xf32> to vector<1x4x32x128xf32>
    %5 = vector.extract_strided_slice %4 {offsets = [0, 0, 0, 0], sizes = [1, 1, 32, 128], strides = [1, 1, 1, 1]} : vector<1x4x32x128xf32> to vector<1x1x32x128xf32>
    %6 = vector.shape_cast %5 : vector<1x1x32x128xf32> to vector<1x32x128xf32>
    %7 = vector.extract_strided_slice %4 {offsets = [0, 1, 0, 0], sizes = [1, 1, 32, 128], strides = [1, 1, 1, 1]} : vector<1x4x32x128xf32> to vector<1x1x32x128xf32>
    %8 = vector.shape_cast %7 : vector<1x1x32x128xf32> to vector<1x32x128xf32>
    %9 = arith.maximumf %6, %8 : vector<1x32x128xf32>
    %10 = vector.extract_strided_slice %4 {offsets = [0, 2, 0, 0], sizes = [1, 1, 32, 128], strides = [1, 1, 1, 1]} : vector<1x4x32x128xf32> to vector<1x1x32x128xf32>
    %11 = vector.shape_cast %10 : vector<1x1x32x128xf32> to vector<1x32x128xf32>
    %12 = vector.extract_strided_slice %4 {offsets = [0, 3, 0, 0], sizes = [1, 1, 32, 128], strides = [1, 1, 1, 1]} : vector<1x4x32x128xf32> to vector<1x1x32x128xf32>
    %13 = vector.shape_cast %12 : vector<1x1x32x128xf32> to vector<1x32x128xf32>
    %14 = arith.maximumf %11, %13 : vector<1x32x128xf32>
    %15 = arith.maximumf %9, %14 : vector<1x32x128xf32>
    %c0_5 = arith.constant 0 : index
    %c0_6 = arith.constant 0 : index
    %16 = vector.load %arg3[%c0_5, %c0_6] : memref<1x128xf32, #tpu.memory_space<vmem>>, vector<1x128xf32>
    %17 = vector.shape_cast %16 : vector<1x128xf32> to vector<1x1x128xf32>
    %18 = vector.broadcast %17 : vector<1x1x128xf32> to vector<1x32x128xf32>
    %19 = arith.addf %15, %18 : vector<1x32x128xf32>
    %cst_7 = arith.constant 0.000000e+00 : f32
    %20 = vector.broadcast %cst_7 : f32 to vector<1x32x128xf32>
    %21 = arith.maximumf %19, %20 : vector<1x32x128xf32>
    %22 = arith.truncf %21 : vector<1x32x128xf32> to vector<1x32x128xbf16>
    %c0_8 = arith.constant 0 : index
    %c0_9 = arith.constant 0 : index
    %c0_10 = arith.constant 0 : index
    %23 = vector.load %arg4[%c0_8, %c0_9, %c0_10] : memref<1x32x128xbf16, #tpu.memory_space<vmem>>, vector<1x32x128xbf16>
    tpu.vector_store %arg4[%c0_8, %c0_9, %c0_10], %22 {strides = array<i32>} : memref<1x32x128xbf16, #tpu.memory_space<vmem>>, vector<1x32x128xbf16>,
    return
  }
  func.func @transform_0(%arg0: i32) -> (i32, i32, i32, i32) {
    %c0_i32 = arith.constant 0 : i32
    %c0_i32_0 = arith.constant 0 : i32
    %c0_i32_1 = arith.constant 0 : i32
    %c0_i32_2 = arith.constant 0 : i32
    return %arg0, %c0_i32, %c0_i32_0, %c0_i32_1 : i32, i32, i32, i32
  }
  func.func @transform_1(%arg0: i32) -> (i32, i32) {
    %c0_i32 = arith.constant 0 : i32
    %c0_i32_0 = arith.constant 0 : i32
    %c0_i32_1 = arith.constant 0 : i32
    return %c0_i32, %c0_i32_0 : i32, i32
  }
  func.func @transform_2(%arg0: i32) -> (i32, i32) {
    %c0_i32 = arith.constant 0 : i32
    %c0_i32_0 = arith.constant 0 : i32
    %c0_i32_1 = arith.constant 0 : i32
    return %c0_i32, %c0_i32_0 : i32, i32
  }
  func.func @transform_3(%arg0: i32) -> (i32, i32, i32) {
    %c0_i32 = arith.constant 0 : i32
    %c0_i32_0 = arith.constant 0 : i32
    %c0_i32_1 = arith.constant 0 : i32
    return %arg0, %c0_i32, %c0_i32_0 : i32, i32, i32
  }
}

module attributes {stable_mosaic.version = 11 : i64} {
  func.func @_fc_chain_kernel(%arg0: i32, %arg1: memref<2x512xbf16, #tpu.memory_space<vmem>>, %arg2: memref<512x128xbf16, #tpu.memory_space<vmem>>, %arg3: memref<1x128xf32, #tpu.memory_space<vmem>>, %arg4: memref<128x128xbf16, #tpu.memory_space<vmem>>, %arg5: memref<1x128xf32, #tpu.memory_space<vmem>>, %arg6: memref<128x128xbf16, #tpu.memory_space<vmem>>, %arg7: memref<1x128xf32, #tpu.memory_space<vmem>>, %arg8: memref<2x128xf32, #tpu.memory_space<vmem>>) attributes {dimension_semantics = [#tpu.dimension_semantics<parallel>], iteration_bounds = array<i64: 1>, scalar_prefetch = 0 : i64, scratch_operands = 0 : i64, tpu.core_type = #tpu.core_type<tc>, window_params = [{transform_indices = @transform_0, window_bounds = array<i64: 2, 512>}, {pipeline_mode = #tpu.pipeline_mode<synchronous>, transform_indices = @transform_1, window_bounds = array<i64: 512, 128>}, {pipeline_mode = #tpu.pipeline_mode<synchronous>, transform_indices = @transform_2, window_bounds = array<i64: 1, 128>}, {pipeline_mode = #tpu.pipeline_mode<synchronous>, transform_indices = @transform_3, window_bounds = array<i64: 128, 128>}, {pipeline_mode = #tpu.pipeline_mode<synchronous>, transform_indices = @transform_4, window_bounds = array<i64: 1, 128>}, {pipeline_mode = #tpu.pipeline_mode<synchronous>, transform_indices = @transform_5, window_bounds = array<i64: 128, 128>}, {pipeline_mode = #tpu.pipeline_mode<synchronous>, transform_indices = @transform_6, window_bounds = array<i64: 1, 128>}, {transform_indices = @transform_7, window_bounds = array<i64: 2, 128>}]} {
    %c0 = arith.constant 0 : index
    %c0_0 = arith.constant 0 : index
    %0 = vector.load %arg1[%c0, %c0_0] : memref<2x512xbf16, #tpu.memory_space<vmem>>, vector<2x512xbf16>
    %c0_1 = arith.constant 0 : index
    %c0_2 = arith.constant 0 : index
    %1 = vector.load %arg2[%c0_1, %c0_2] : memref<512x128xbf16, #tpu.memory_space<vmem>>, vector<512x128xbf16>
    %cst = arith.constant dense<0.000000e+00> : vector<2x128xf32>
    %2 = tpu.matmul %0, %1, %cst {dimension_numbers = #tpu.dot_dimension_numbers<[1], [0], [0], [1], [0, 0, 1, 1], [], []>} : vector<2x512xbf16>, vector<512x128xbf16>, vector<2x128xf32> -> vector<2x128xf32>
    %c0_3 = arith.constant 0 : index
    %c0_4 = arith.constant 0 : index
    %3 = vector.load %arg3[%c0_3, %c0_4] : memref<1x128xf32, #tpu.memory_space<vmem>>, vector<1x128xf32>
    %4 = vector.broadcast %3 : vector<1x128xf32> to vector<2x128xf32>
    %5 = arith.addf %2, %4 : vector<2x128xf32>
    %cst_5 = arith.constant 0.000000e+00 : f32
    %6 = vector.broadcast %cst_5 : f32 to vector<2x128xf32>
    %7 = arith.maximumf %5, %6 : vector<2x128xf32>
    %8 = arith.truncf %7 : vector<2x128xf32> to vector<2x128xbf16>
    %c0_6 = arith.constant 0 : index
    %c0_7 = arith.constant 0 : index
    %9 = vector.load %arg4[%c0_6, %c0_7] : memref<128x128xbf16, #tpu.memory_space<vmem>>, vector<128x128xbf16>
    %cst_8 = arith.constant dense<0.000000e+00> : vector<2x128xf32>
    %10 = tpu.matmul %8, %9, %cst_8 {dimension_numbers = #tpu.dot_dimension_numbers<[1], [0], [0], [1], [0, 0, 1, 1], [], []>} : vector<2x128xbf16>, vector<128x128xbf16>, vector<2x128xf32> -> vector<2x128xf32>
    %c0_9 = arith.constant 0 : index
    %c0_10 = arith.constant 0 : index
    %11 = vector.load %arg5[%c0_9, %c0_10] : memref<1x128xf32, #tpu.memory_space<vmem>>, vector<1x128xf32>
    %12 = vector.broadcast %11 : vector<1x128xf32> to vector<2x128xf32>
    %13 = arith.addf %10, %12 : vector<2x128xf32>
    %cst_11 = arith.constant 0.000000e+00 : f32
    %14 = vector.broadcast %cst_11 : f32 to vector<2x128xf32>
    %15 = arith.maximumf %13, %14 : vector<2x128xf32>
    %16 = arith.truncf %15 : vector<2x128xf32> to vector<2x128xbf16>
    %c0_12 = arith.constant 0 : index
    %c0_13 = arith.constant 0 : index
    %17 = vector.load %arg6[%c0_12, %c0_13] : memref<128x128xbf16, #tpu.memory_space<vmem>>, vector<128x128xbf16>
    %cst_14 = arith.constant dense<0.000000e+00> : vector<2x128xf32>
    %18 = tpu.matmul %16, %17, %cst_14 {dimension_numbers = #tpu.dot_dimension_numbers<[1], [0], [0], [1], [0, 0, 1, 1], [], []>} : vector<2x128xbf16>, vector<128x128xbf16>, vector<2x128xf32> -> vector<2x128xf32>
    %c0_15 = arith.constant 0 : index
    %c0_16 = arith.constant 0 : index
    %19 = vector.load %arg7[%c0_15, %c0_16] : memref<1x128xf32, #tpu.memory_space<vmem>>, vector<1x128xf32>
    %20 = vector.broadcast %19 : vector<1x128xf32> to vector<2x128xf32>
    %21 = arith.addf %18, %20 : vector<2x128xf32>
    %cst_17 = arith.constant dense<0xFF800000> : vector<2xf32>
    %22 = vector.multi_reduction <maximumf>, %21, %cst_17 [1] : vector<2x128xf32> to vector<2xf32>
    %23 = vector.shape_cast %22 : vector<2xf32> to vector<2x1xf32>
    %24 = vector.broadcast %23 : vector<2x1xf32> to vector<2x128xf32>
    %25 = arith.subf %21, %24 : vector<2x128xf32>
    %26 = math.exp %25 : vector<2x128xf32>
    %cst_18 = arith.constant dense<0.000000e+00> : vector<2xf32>
    %27 = vector.multi_reduction <add>, %26, %cst_18 [1] : vector<2x128xf32> to vector<2xf32>
    %28 = vector.shape_cast %27 : vector<2xf32> to vector<2x1xf32>
    %29 = math.log %28 : vector<2x1xf32>
    %30 = vector.broadcast %29 : vector<2x1xf32> to vector<2x128xf32>
    %31 = arith.subf %25, %30 : vector<2x128xf32>
    %c0_19 = arith.constant 0 : index
    %c0_20 = arith.constant 0 : index
    %32 = vector.load %arg8[%c0_19, %c0_20] : memref<2x128xf32, #tpu.memory_space<vmem>>, vector<2x128xf32>
    tpu.vector_store %arg8[%c0_19, %c0_20], %31 {strides = array<i32>} : memref<2x128xf32, #tpu.memory_space<vmem>>, vector<2x128xf32>,
    return
  }
  func.func @transform_0(%arg0: i32) -> (i32, i32) {
    %c0_i32 = arith.constant 0 : i32
    %c0_i32_0 = arith.constant 0 : i32
    return %arg0, %c0_i32 : i32, i32
  }
  func.func @transform_1(%arg0: i32) -> (i32, i32) {
    %c0_i32 = arith.constant 0 : i32
    %c0_i32_0 = arith.constant 0 : i32
    %c0_i32_1 = arith.constant 0 : i32
    return %c0_i32, %c0_i32_0 : i32, i32
  }
  func.func @transform_2(%arg0: i32) -> (i32, i32) {
    %c0_i32 = arith.constant 0 : i32
    %c0_i32_0 = arith.constant 0 : i32
    %c0_i32_1 = arith.constant 0 : i32
    return %c0_i32, %c0_i32_0 : i32, i32
  }
  func.func @transform_3(%arg0: i32) -> (i32, i32) {
    %c0_i32 = arith.constant 0 : i32
    %c0_i32_0 = arith.constant 0 : i32
    %c0_i32_1 = arith.constant 0 : i32
    return %c0_i32, %c0_i32_0 : i32, i32
  }
  func.func @transform_4(%arg0: i32) -> (i32, i32) {
    %c0_i32 = arith.constant 0 : i32
    %c0_i32_0 = arith.constant 0 : i32
    %c0_i32_1 = arith.constant 0 : i32
    return %c0_i32, %c0_i32_0 : i32, i32
  }
  func.func @transform_5(%arg0: i32) -> (i32, i32) {
    %c0_i32 = arith.constant 0 : i32
    %c0_i32_0 = arith.constant 0 : i32
    %c0_i32_1 = arith.constant 0 : i32
    return %c0_i32, %c0_i32_0 : i32, i32
  }
  func.func @transform_6(%arg0: i32) -> (i32, i32) {
    %c0_i32 = arith.constant 0 : i32
    %c0_i32_0 = arith.constant 0 : i32
    %c0_i32_1 = arith.constant 0 : i32
    return %c0_i32, %c0_i32_0 : i32, i32
  }
  func.func @transform_7(%arg0: i32) -> (i32, i32) {
    %c0_i32 = arith.constant 0 : i32
    %c0_i32_0 = arith.constant 0 : i32
    return %arg0, %c0_i32 : i32, i32
  }
}

</mosaic_0001>

<llo_original>
// kernel: cnn_forward.3
$region0: #{cnn_forward.3}
  #allocation0 [shape = 'u32[]', space=smem, size = 0x4, offset = 0x4, fixed_abs, tag = 'smem constant byte address 0x4 - core index']
  #allocation1 [shape = 'u32[144,128]{1,0:T(1,128)}', space=vmem, size = 0x12000, scoped, tag = 'internal scratch']
  %s0 = inlined_call_operand.vmem [shape: bf16[2,4,208,128], index: 0, kind: input, shape index: {}]
  %s1 = inlined_call_operand.vmem [shape: bf16[128,128], index: 1, kind: input, shape index: {}]
  %s2 = inlined_call_operand.vmem [shape: f32[1,128], index: 2, kind: input, shape index: {}]
  %s3 = inlined_call_operand.vmem [shape: bf16[2,208,128], index: 3, kind: output, shape index: {}]
  %s4 = sld [smem:[#allocation0]]
  $region45: #{cnn_forward.3} parent=0
    _
  %s6 = ssub.s32 1, %s4
  %s7 = scalar_select 0, %s6, %s4
  loop: start=0, step=1, limit=4
  $region2: #{cnn_forward.3} parent=0 // loop_pre_header
    _
  $region3: #{cnn_forward.3} parent=0 // loop_header
    %s9 = sphi 0, %s13
    %p10 = scmp.ge.s32.totalorder %s9, 4
    %s19 = sphi 0, %s21
    %s22 = sphi 0, %s19
    %s23 = sphi 0, %s22
    %s39 = sphi 0, %s23
    %s43 = sphi 0, %s43
    %s45 = sphi 0, %s43
    %s46 = sphi 0, %s45
    %s60 = sphi 0, %s46
    %s64 = sphi 0, %s64
    %s66 = sphi 0, %s64
    %s67 = sphi 0, %s66
    %s81 = sphi 0, %s67
    %s87 = sphi 0, %s89
    %s90 = sphi 0, %s87
    %s91 = sphi 0, %s90
    %s107 = sphi 0, %s91
  $region4: #{cnn_forward.3} parent=0 // loop_header_branch
    %12 = sbr.rel (%p10) target = $region8
  $region5: #{cnn_forward.3} parent=0 // loop_body
    %s14 = ssub.s32 %s9, 1
    %s15 = ssub.s32 %s9, 2
    %s16 = sadd.s32 %s9, 1
    %s17 = ssub.s32 %s9, %s16
    %p18 = scmp.eq.s32.totalorder %s17, 0
    %s20 = sadd.s32 %s19, 1
    %s21 = scalar_select %p18, %s19, %s20
    %p24 = pneg %p18
    %p25 = scmp.eq.s32.totalorder %s9, 1
    %p26 = por %p24, %p25
    %p27 = scmp.ne.s32.totalorder %s19, %s22
    %p28 = scmp.eq.s32.totalorder %s9, 0
    %p29 = por %p27, %p28
    %p30 = scmp.ne.s32.totalorder %s19, %s22
    %p31 = scmp.eq.s32.totalorder %s14, 1
    %p32 = por %p30, %p31
    %p33 = scmp.ne.s32.totalorder %s22, %s23
    %p34 = scmp.eq.s32.totalorder %s14, 0
    %p35 = por %p33, %p34
    %p36 = scmp.ne.s32.totalorder %s22, %s23
    %p37 = scmp.eq.s32.totalorder %s15, 1
    %p38 = por %p36, %p37
    %p40 = scmp.ne.s32.totalorder %s23, %s39
    %p41 = scmp.eq.s32.totalorder %s15, 0
    %p42 = por %p40, %p41
    %s44 = sadd.s32 %s43, 1
    %p47 = scmp.eq.s32.totalorder %s9, 1
    %p48 = scmp.ne.s32.totalorder %s43, %s45
    %p49 = scmp.eq.s32.totalorder %s9, 0
    %p50 = por %p48, %p49
    %p51 = scmp.ne.s32.totalorder %s43, %s45
    %p52 = scmp.eq.s32.totalorder %s14, 1
    %p53 = por %p51, %p52
    %p54 = scmp.ne.s32.totalorder %s45, %s46
    %p55 = scmp.eq.s32.totalorder %s14, 0
    %p56 = por %p54, %p55
    %p57 = scmp.ne.s32.totalorder %s45, %s46
    %p58 = scmp.eq.s32.totalorder %s15, 1
    %p59 = por %p57, %p58
    %p61 = scmp.ne.s32.totalorder %s46, %s60
    %p62 = scmp.eq.s32.totalorder %s15, 0
    %p63 = por %p61, %p62
    %s65 = sadd.s32 %s64, 1
    %p68 = scmp.eq.s32.totalorder %s9, 1
    %p69 = scmp.ne.s32.totalorder %s64, %s66
    %p70 = scmp.eq.s32.totalorder %s9, 0
    %p71 = por %p69, %p70
    %p72 = scmp.ne.s32.totalorder %s64, %s66
    %p73 = scmp.eq.s32.totalorder %s14, 1
    %p74 = por %p72, %p73
    %p75 = scmp.ne.s32.totalorder %s66, %s67
    %p76 = scmp.eq.s32.totalorder %s14, 0
    %p77 = por %p75, %p76
    %p78 = scmp.ne.s32.totalorder %s66, %s67
    %p79 = scmp.eq.s32.totalorder %s15, 1
    %p80 = por %p78, %p79
    %p82 = scmp.ne.s32.totalorder %s67, %s81
    %p83 = scmp.eq.s32.totalorder %s15, 0
    %p84 = por %p82, %p83
    %s85 = ssub.s32 %s9, %s16
    %p86 = scmp.eq.s32.totalorder %s85, 0
    %s88 = sadd.s32 %s87, 1
    %s89 = scalar_select %p86, %s87, %s88
    %p92 = pneg %p86
    %p93 = scmp.eq.s32.totalorder %s9, 1
    %p94 = por %p92, %p93
    %p95 = scmp.ne.s32.totalorder %s87, %s90
    %p96 = scmp.eq.s32.totalorder %s9, 0
    %p97 = por %p95, %p96
    %p98 = scmp.ne.s32.totalorder %s87, %s90
    %p99 = scmp.eq.s32.totalorder %s14, 1
    %p100 = por %p98, %p99
    %p101 = scmp.ne.s32.totalorder %s90, %s91
    %p102 = scmp.eq.s32.totalorder %s14, 0
    %p103 = por %p101, %p102
    %p104 = scmp.ne.s32.totalorder %s90, %s91
    %p105 = scmp.eq.s32.totalorder %s15, 1
    %p106 = por %p104, %p105
    %p108 = scmp.ne.s32.totalorder %s91, %s107
    %p109 = scmp.eq.s32.totalorder %s15, 0
    %p110 = por %p108, %p109
    %p111 = scmp.le.s32.totalorder 1, %s9
    %p112 = scmp.lt.s32.totalorder %s9, 3
    %p113 = pnand %p111, %p112
    %p114 = pneg %p113
    // Predicated region
    $region9: #{cnn_forward.3} parent=5 // pred_check
      _
    $region10: #{cnn_forward.3} parent=5 // pred_check_branch
      %116 = sbr.rel (%p113) target = $region12
    $region11: #{cnn_forward.3} parent=5 // pred_region
      %s117 = ssub.s32 %s9, 1
      // Predicated region
      $region13: #{cnn_forward.3} parent=11 // pred_check
        %p118 = pneg %p56
      $region14: #{cnn_forward.3} parent=11 // pred_check_branch
        %120 = sbr.rel (%p118) target = $region16
      $region15: #{cnn_forward.3} parent=11 // pred_region
        _
      $region16: #{cnn_forward.3} parent=11 // pred_fallthru
        _
      // Predicated region
      $region17: #{cnn_forward.3} parent=11 // pred_check
        %p121 = pneg %p77
      $region18: #{cnn_forward.3} parent=11 // pred_check_branch
        %123 = sbr.rel (%p121) target = $region20
      $region19: #{cnn_forward.3} parent=11 // pred_region
        _
      $region20: #{cnn_forward.3} parent=11 // pred_fallthru
        _
    $region12: #{cnn_forward.3} parent=5 // pred_fallthru
      _
    %p124 = scmp.lt.s32.totalorder %s9, 2
    // Predicated region
    $region21: #{cnn_forward.3} parent=5 // pred_check
      %p125 = pneg %p124
    $region22: #{cnn_forward.3} parent=5 // pred_check_branch
      %127 = sbr.rel (%p125) target = $region24
    $region23: #{cnn_forward.3} parent=5 // pred_region
      // Predicated region
      $region25: #{cnn_forward.3} parent=23 // pred_check
        %p128 = pneg %p29
      $region26: #{cnn_forward.3} parent=23 // pred_check_branch
        %130 = sbr.rel (%p128) target = $region28
      $region27: #{cnn_forward.3} parent=23 // pred_region
        %p131 = scmp.lt.s32.totalorder %s9, 1
        %s132 = scalar_select %p131, %s9, 1
        %s133 = smul.addr %s132, 104
        %s134 = smul.addr %s133, 4
        %s135 = scalar_lea.vmem %s0, %s134
      $region28: #{cnn_forward.3} parent=23 // pred_fallthru
        _
    $region24: #{cnn_forward.3} parent=5 // pred_fallthru
      _
    %p136 = scmp.le.s32.totalorder 1, %s9
    %p137 = scmp.lt.s32.totalorder %s9, 3
    %p138 = pnand %p136, %p137
    %p139 = pneg %p138
    // Predicated region
    $region29: #{cnn_forward.3} parent=5 // pred_check
      _
    $region30: #{cnn_forward.3} parent=5 // pred_check_branch
      %141 = sbr.rel (%p138) target = $region32
    $region31: #{cnn_forward.3} parent=5 // pred_region
      %s142 = ssub.s32 %s9, 1
      %p143 = scmp.lt.s32.totalorder %s14, 1
      %s144 = scalar_select %p143, %s14, 1
      %s145 = smul.addr %s144, 104
      %s146 = smul.addr %s145, 4
      %s147 = scalar_lea.vmem %s0, %s146
      %p148 = pneg %p35
      %p149 = pneg %p32
      %p150 = pneg %p56
      %p151 = pneg %p53
      %p152 = pneg %p77
      %p153 = pneg %p74
      %p154 = pneg %p103
      %p155 = pneg %p100
      %p156 = scmp.lt.s32.totalorder %s14, 1
      %s157 = scalar_select %p156, %s14, 1
      %s158 = smul.addr %s157, 26
      %s159 = smul.addr %s158, 4
      %s160 = scalar_lea.vmem %s3, %s159
      %p161 = scmp.lt.s32.totalorder %s14, 1
      %s162 = scalar_select %p161, %s14, 1
      %s163 = smul.addr %s162, 104
      %s164 = smul.addr %s163, 4
      %s165 = scalar_lea.vmem %s0, %s164
      %p166 = scmp.lt.s32.totalorder %s14, 1
      %s167 = scalar_select %p166, %s14, 1
      %s168 = smul.addr %s167, 26
      %s169 = smul.addr %s168, 4
      %s170 = scalar_lea.vmem %s3, %s169
      %v172 = vld [vmem:[%s165] sm:$0xf]
      %v173 = vld [vmem:[%s165 + $0x4] sm:$0xf]
      %v174 = vld [vmem:[%s165 + $0x8] sm:$0xf]
      %v175 = vld [vmem:[%s165 + $0xc] sm:$0xf]
      %v176 = vld [vmem:[%s165 + $0x10] sm:$0xf]
      %v177 = vld [vmem:[%s165 + $0x14] sm:$0xf]
      %v178 = vld [vmem:[%s165 + $0x18] sm:$0xf]
      %v179 = vld [vmem:[%s165 + $0x1c] sm:$0xf]
      %v180 = vld [vmem:[%s165 + $0x20] sm:$0xf]
      %v181 = vld [vmem:[%s165 + $0x24] sm:$0xf]
      %v182 = vld [vmem:[%s165 + $0x28] sm:$0xf]
      %v183 = vld [vmem:[%s165 + $0x2c] sm:$0xf]
      %v184 = vld [vmem:[%s165 + $0x30] sm:$0xf]
      %v185 = vld [vmem:[%s165 + $0x34] sm:$0xf]
      %v186 = vld [vmem:[%s165 + $0x38] sm:$0xf]
      %v187 = vld [vmem:[%s165 + $0x3c] sm:$0xf]
      %v188 = vld [vmem:[%s165 + $0x40] sm:$0xf]
      %v189 = vld [vmem:[%s165 + $0x44] sm:$0xf]
      %v190 = vld [vmem:[%s165 + $0x48] sm:$0xf]
      %v191 = vld [vmem:[%s165 + $0x4c] sm:$0xf]
      %v192 = vld [vmem:[%s165 + $0x50] sm:$0xf]
      %v193 = vld [vmem:[%s165 + $0x54] sm:$0xf]
      %v194 = vld [vmem:[%s165 + $0x58] sm:$0xf]
      %v195 = vld [vmem:[%s165 + $0x5c] sm:$0xf]
      %v196 = vld [vmem:[%s165 + $0x60] sm:$0xf]
      %v197 = vld [vmem:[%s165 + $0x64] sm:$0xf]
      %v198 = vld [vmem:[%s165 + $0x68] sm:$0xf]
      %v199 = vld [vmem:[%s165 + $0x6c] sm:$0xf]
      %v200 = vld [vmem:[%s165 + $0x70] sm:$0xf]
      %v201 = vld [vmem:[%s165 + $0x74] sm:$0xf]
      %v202 = vld [vmem:[%s165 + $0x78] sm:$0xf]
      %v203 = vld [vmem:[%s165 + $0x7c] sm:$0xf]
      %v204 = vld [vmem:[%s165 + $0x80] sm:$0xf]
      %v205 = vld [vmem:[%s165 + $0x84] sm:$0xf]
      %v206 = vld [vmem:[%s165 + $0x88] sm:$0xf]
      %v207 = vld [vmem:[%s165 + $0x8c] sm:$0xf]
      %v208 = vld [vmem:[%s165 + $0x90] sm:$0xf]
      %v209 = vld [vmem:[%s165 + $0x94] sm:$0xf]
      %v210 = vld [vmem:[%s165 + $0x98] sm:$0xf]
      %v211 = vld [vmem:[%s165 + $0x9c] sm:$0xf]
      %v212 = vld [vmem:[%s165 + $0xa0] sm:$0xf]
      %v213 = vld [vmem:[%s165 + $0xa4] sm:$0xf]
      %v214 = vld [vmem:[%s165 + $0xa8] sm:$0xf]
      %v215 = vld [vmem:[%s165 + $0xac] sm:$0xf]
      %v216 = vld [vmem:[%s165 + $0xb0] sm:$0xf]
      %v217 = vld [vmem:[%s165 + $0xb4] sm:$0xf]
      %v218 = vld [vmem:[%s165 + $0xb8] sm:$0xf]
      %v219 = vld [vmem:[%s165 + $0xbc] sm:$0xf]
      %v220 = vld [vmem:[%s165 + $0xc0] sm:$0xf]
      %v221 = vld [vmem:[%s165 + $0xc4] sm:$0xf]
      %v222 = vld [vmem:[%s165 + $0xc8] sm:$0xf]
      %v223 = vld [vmem:[%s165 + $0xcc] sm:$0xf]
      %v224 = vld [vmem:[%s165 + $0xd0] sm:$0xf]
      %v225 = vld [vmem:[%s165 + $0xd4] sm:$0xf]
      %v226 = vld [vmem:[%s165 + $0xd8] sm:$0xf]
      %v227 = vld [vmem:[%s165 + $0xdc] sm:$0xf]
      %v228 = vld [vmem:[%s165 + $0xe0] sm:$0xf]
      %v229 = vld [vmem:[%s165 + $0xe4] sm:$0xf]
      %v230 = vld [vmem:[%s165 + $0xe8] sm:$0xf]
      %v231 = vld [vmem:[%s165 + $0xec] sm:$0xf]
      %v232 = vld [vmem:[%s165 + $0xf0] sm:$0xf]
      %v233 = vld [vmem:[%s165 + $0xf4] sm:$0xf]
      %v234 = vld [vmem:[%s165 + $0xf8] sm:$0xf]
      %v235 = vld [vmem:[%s165 + $0xfc] sm:$0xf]
      %v236 = vld [vmem:[%s165 + $0x100] sm:$0xf]
      %v237 = vld [vmem:[%s165 + $0x104] sm:$0xf]
      %v238 = vld [vmem:[%s165 + $0x108] sm:$0xf]
      %v239 = vld [vmem:[%s165 + $0x10c] sm:$0xf]
      %v240 = vld [vmem:[%s165 + $0x110] sm:$0xf]
      %v241 = vld [vmem:[%s165 + $0x114] sm:$0xf]
      %v242 = vld [vmem:[%s165 + $0x118] sm:$0xf]
      %v243 = vld [vmem:[%s165 + $0x11c] sm:$0xf]
      %v244 = vld [vmem:[%s165 + $0x120] sm:$0xf]
      %v245 = vld [vmem:[%s165 + $0x124] sm:$0xf]
      %v246 = vld [vmem:[%s165 + $0x128] sm:$0xf]
      %v247 = vld [vmem:[%s165 + $0x12c] sm:$0xf]
      %v248 = vld [vmem:[%s165 + $0x130] sm:$0xf]
      %v249 = vld [vmem:[%s165 + $0x134] sm:$0xf]
      %v250 = vld [vmem:[%s165 + $0x138] sm:$0xf]
      %v251 = vld [vmem:[%s165 + $0x13c] sm:$0xf]
      %v252 = vld [vmem:[%s165 + $0x140] sm:$0xf]
      %v253 = vld [vmem:[%s165 + $0x144] sm:$0xf]
      %v254 = vld [vmem:[%s165 + $0x148] sm:$0xf]
      %v255 = vld [vmem:[%s165 + $0x14c] sm:$0xf]
      %v256 = vld [vmem:[%s165 + $0x150] sm:$0xf]
      %v257 = vld [vmem:[%s165 + $0x154] sm:$0xf]
      %v258 = vld [vmem:[%s165 + $0x158] sm:$0xf]
      %v259 = vld [vmem:[%s165 + $0x15c] sm:$0xf]
      %v260 = vld [vmem:[%s165 + $0x160] sm:$0xf]
      %v261 = vld [vmem:[%s165 + $0x164] sm:$0xf]
      %v262 = vld [vmem:[%s165 + $0x168] sm:$0xf]
      %v263 = vld [vmem:[%s165 + $0x16c] sm:$0xf]
      %v264 = vld [vmem:[%s165 + $0x170] sm:$0xf]
      %v265 = vld [vmem:[%s165 + $0x174] sm:$0xf]
      %v266 = vld [vmem:[%s165 + $0x178] sm:$0xf]
      %v267 = vld [vmem:[%s165 + $0x17c] sm:$0xf]
      %v268 = vld [vmem:[%s165 + $0x180] sm:$0xf]
      %v269 = vld [vmem:[%s165 + $0x184] sm:$0xf]
      %v270 = vld [vmem:[%s165 + $0x188] sm:$0xf]
      %v271 = vld [vmem:[%s165 + $0x18c] sm:$0xf]
      %v272 = vld [vmem:[%s165 + $0x190] sm:$0xf]
      %v273 = vld [vmem:[%s165 + $0x194] sm:$0xf]
      %v274 = vld [vmem:[%s165 + $0x198] sm:$0xf]
      %v275 = vld [vmem:[%s165 + $0x19c] sm:$0xf]
      %v276 = vld [vmem:[%s1] sm:$0xf]
      %v277 = vld [vmem:[%s1 + $0x4] sm:$0xf]
      %v278 = vld [vmem:[%s1 + $0x8] sm:$0xf]
      %v279 = vld [vmem:[%s1 + $0xc] sm:$0xf]
      %v280 = vld [vmem:[%s1 + $0x10] sm:$0xf]
      %v281 = vld [vmem:[%s1 + $0x14] sm:$0xf]
      %v282 = vld [vmem:[%s1 + $0x18] sm:$0xf]
      %v283 = vld [vmem:[%s1 + $0x1c] sm:$0xf]
      %v284 = vld [vmem:[%s1 + $0x20] sm:$0xf]
      %v285 = vld [vmem:[%s1 + $0x24] sm:$0xf]
      %v286 = vld [vmem:[%s1 + $0x28] sm:$0xf]
      %v287 = vld [vmem:[%s1 + $0x2c] sm:$0xf]
      %v288 = vld [vmem:[%s1 + $0x30] sm:$0xf]
      %v289 = vld [vmem:[%s1 + $0x34] sm:$0xf]
      %v290 = vld [vmem:[%s1 + $0x38] sm:$0xf]
      %v291 = vld [vmem:[%s1 + $0x3c] sm:$0xf]
      %v396 = vunpack.c.l.b16 %v172
      %v397 = vunpack.c.l.b16 %v173
      %v398 = vunpack.c.l.b16 %v174
      %v399 = vunpack.c.l.b16 %v175
      %v400 = vunpack.c.l.b16 %v176
      %v401 = vunpack.c.l.b16 %v177
      %v402 = vunpack.c.l.b16 %v178
      %v403 = vunpack.c.l.b16 %v179
      %v404 = vunpack.c.l.b16 %v180
      %v405 = vunpack.c.l.b16 %v181
      %v406 = vunpack.c.l.b16 %v182
      %v407 = vunpack.c.l.b16 %v183
      %v408 = vunpack.c.l.b16 %v184
      %v409 = vunpack.c.l.b16 %v185
      %v410 = vunpack.c.l.b16 %v186
      %v411 = vunpack.c.l.b16 %v187
      %v412 = vunpack.c.l.b16 %v188
      %v413 = vunpack.c.l.b16 %v189
      %v414 = vunpack.c.l.b16 %v190
      %v415 = vunpack.c.l.b16 %v191
      %v416 = vunpack.c.l.b16 %v192
      %v417 = vunpack.c.l.b16 %v193
      %v418 = vunpack.c.l.b16 %v194
      %v419 = vunpack.c.l.b16 %v195
      %v420 = vunpack.c.l.b16 %v196
      %v421 = vunpack.c.l.b16 %v197
      %v422 = vunpack.c.l.b16 %v198
      %v423 = vunpack.c.l.b16 %v199
      %v424 = vunpack.c.l.b16 %v200
      %v425 = vunpack.c.l.b16 %v201
      %v426 = vunpack.c.l.b16 %v202
      %v427 = vunpack.c.l.b16 %v203
      %v428 = vunpack.c.l.b16 %v204
      %v429 = vunpack.c.l.b16 %v205
      %v430 = vunpack.c.l.b16 %v206
      %v431 = vunpack.c.l.b16 %v207
      %v432 = vunpack.c.l.b16 %v208
      %v433 = vunpack.c.l.b16 %v209
      %v434 = vunpack.c.l.b16 %v210
      %v435 = vunpack.c.l.b16 %v211
      %v436 = vunpack.c.l.b16 %v212
      %v437 = vunpack.c.l.b16 %v213
      %v438 = vunpack.c.l.b16 %v214
      %v439 = vunpack.c.l.b16 %v215
      %v440 = vunpack.c.l.b16 %v216
      %v441 = vunpack.c.l.b16 %v217
      %v442 = vunpack.c.l.b16 %v218
      %v443 = vunpack.c.l.b16 %v219
      %v444 = vunpack.c.l.b16 %v220
      %v445 = vunpack.c.l.b16 %v221
      %v446 = vunpack.c.l.b16 %v222
      %v447 = vunpack.c.l.b16 %v223
      %v448 = vunpack.c.l.b16 %v224
      %v449 = vunpack.c.l.b16 %v225
      %v450 = vunpack.c.l.b16 %v226
      %v451 = vunpack.c.l.b16 %v227
      %v452 = vunpack.c.l.b16 %v228
      %v453 = vunpack.c.l.b16 %v229
      %v454 = vunpack.c.l.b16 %v230
      %v455 = vunpack.c.l.b16 %v231
      %v456 = vunpack.c.l.b16 %v232
      %v457 = vunpack.c.l.b16 %v233
      %v458 = vunpack.c.l.b16 %v234
      %v459 = vunpack.c.l.b16 %v235
      %v460 = vunpack.c.l.b16 %v236
      %v461 = vunpack.c.l.b16 %v237
      %v462 = vunpack.c.l.b16 %v238
      %v463 = vunpack.c.l.b16 %v239
      %v464 = vunpack.c.l.b16 %v240
      %v465 = vunpack.c.l.b16 %v241
      %v466 = vunpack.c.l.b16 %v242
      %v467 = vunpack.c.l.b16 %v243
      %v468 = vunpack.c.l.b16 %v244
      %v469 = vunpack.c.l.b16 %v245
      %v470 = vunpack.c.l.b16 %v246
      %v471 = vunpack.c.l.b16 %v247
      %v472 = vunpack.c.l.b16 %v248
      %v473 = vunpack.c.l.b16 %v249
      %v474 = vunpack.c.l.b16 %v250
      %v475 = vunpack.c.l.b16 %v251
      %v476 = vunpack.c.l.b16 %v252
      %v477 = vunpack.c.l.b16 %v253
      %v478 = vunpack.c.l.b16 %v254
      %v479 = vunpack.c.l.b16 %v255
      %v480 = vunpack.c.l.b16 %v256
      %v481 = vunpack.c.l.b16 %v257
      %v482 = vunpack.c.l.b16 %v258
      %v483 = vunpack.c.l.b16 %v259
      %v484 = vunpack.c.l.b16 %v260
      %v485 = vunpack.c.l.b16 %v261
      %v486 = vunpack.c.l.b16 %v262
      %v487 = vunpack.c.l.b16 %v263
      %v488 = vunpack.c.l.b16 %v264
      %v489 = vunpack.c.l.b16 %v265
      %v490 = vunpack.c.l.b16 %v266
      %v491 = vunpack.c.l.b16 %v267
      %v492 = vunpack.c.l.b16 %v268
      %v493 = vunpack.c.l.b16 %v269
      %v494 = vunpack.c.l.b16 %v270
      %v495 = vunpack.c.l.b16 %v271
      %v496 = vunpack.c.l.b16 %v272
      %v497 = vunpack.c.l.b16 %v273
      %v498 = vunpack.c.l.b16 %v274
      %v499 = vunpack.c.l.b16 %v275
      %v500 = vpack.c.b16 %v397, %v396
      %v501 = vpack.c.b16 %v399, %v398
      %v502 = vpack.c.b16 %v401, %v400
      %v503 = vpack.c.b16 %v403, %v402
      %v504 = vpack.c.b16 %v405, %v404
      %v505 = vpack.c.b16 %v407, %v406
      %v506 = vpack.c.b16 %v409, %v408
      %v507 = vpack.c.b16 %v411, %v410
      %v508 = vpack.c.b16 %v413, %v412
      %v509 = vpack.c.b16 %v415, %v414
      %v510 = vpack.c.b16 %v417, %v416
      %v511 = vpack.c.b16 %v419, %v418
      %v512 = vpack.c.b16 %v421, %v420
      %v513 = vpack.c.b16 %v423, %v422
      %v514 = vpack.c.b16 %v425, %v424
      %v515 = vpack.c.b16 %v427, %v426
      %v516 = vpack.c.b16 %v429, %v428
      %v517 = vpack.c.b16 %v431, %v430
      %v518 = vpack.c.b16 %v433, %v432
      %v519 = vpack.c.b16 %v435, %v434
      %v520 = vpack.c.b16 %v437, %v436
      %v521 = vpack.c.b16 %v439, %v438
      %v522 = vpack.c.b16 %v441, %v440
      %v523 = vpack.c.b16 %v443, %v442
      %v524 = vpack.c.b16 %v445, %v444
      %v525 = vpack.c.b16 %v447, %v446
      %v526 = vpack.c.b16 %v449, %v448
      %v527 = vpack.c.b16 %v451, %v450
      %v528 = vpack.c.b16 %v453, %v452
      %v529 = vpack.c.b16 %v455, %v454
      %v530 = vpack.c.b16 %v457, %v456
      %v531 = vpack.c.b16 %v459, %v458
      %v532 = vpack.c.b16 %v461, %v460
      %v533 = vpack.c.b16 %v463, %v462
      %v534 = vpack.c.b16 %v465, %v464
      %v535 = vpack.c.b16 %v467, %v466
      %v536 = vpack.c.b16 %v469, %v468
      %v537 = vpack.c.b16 %v471, %v470
      %v538 = vpack.c.b16 %v473, %v472
      %v539 = vpack.c.b16 %v475, %v474
      %v540 = vpack.c.b16 %v477, %v476
      %v541 = vpack.c.b16 %v479, %v478
      %v542 = vpack.c.b16 %v481, %v480
      %v543 = vpack.c.b16 %v483, %v482
      %v544 = vpack.c.b16 %v485, %v484
      %v545 = vpack.c.b16 %v487, %v486
      %v546 = vpack.c.b16 %v489, %v488
      %v547 = vpack.c.b16 %v491, %v490
      %v548 = vpack.c.b16 %v493, %v492
      %v549 = vpack.c.b16 %v495, %v494
      %v550 = vpack.c.b16 %v497, %v496
      %v551 = vpack.c.b16 %v499, %v498
      %v620 = vunpack.c.l.b16 %v276
      %v621 = vunpack.c.l.b16 %v277
      %v622 = vunpack.c.l.b16 %v278
      %v623 = vunpack.c.l.b16 %v279
      %v624 = vunpack.c.l.b16 %v280
      %v625 = vunpack.c.l.b16 %v281
      %v626 = vunpack.c.l.b16 %v282
      %v627 = vunpack.c.l.b16 %v283
      %v628 = vunpack.c.l.b16 %v284
      %v629 = vunpack.c.l.b16 %v285
      %v630 = vunpack.c.l.b16 %v286
      %v631 = vunpack.c.l.b16 %v287
      %v632 = vunpack.c.l.b16 %v288
      %v633 = vunpack.c.l.b16 %v289
      %v634 = vunpack.c.l.b16 %v290
      %v635 = vunpack.c.l.b16 %v291
      %v636 = vpack.c.b16 %v621, %v620
      %v637 = vpack.c.b16 %v623, %v622
      %v638 = vpack.c.b16 %v625, %v624
      %v639 = vpack.c.b16 %v627, %v626
      %v640 = vpack.c.b16 %v629, %v628
      %v641 = vpack.c.b16 %v631, %v630
      %v642 = vpack.c.b16 %v633, %v632
      %v643 = vpack.c.b16 %v635, %v634
      %652 = vmatprep.subr.bf16.mxu0 0
      %653 = vmatpush1.bf16.msra.mxu0 %v643
      %654 = vmatprep.subr.bf16.mxu0 0
      %655 = vmatpush1.bf16.msra.mxu0 %v642
      %656 = vmatprep.subr.bf16.mxu0 0
      %657 = vmatpush1.bf16.msra.mxu0 %v641
      %658 = vmatprep.subr.bf16.mxu0 0
      %659 = vmatpush1.bf16.msra.mxu0 %v640
      %660 = vmatprep.subr.bf16.mxu0 0
      %661 = vmatpush1.bf16.msra.mxu0 %v639
      %662 = vmatprep.subr.bf16.mxu0 0
      %663 = vmatpush1.bf16.msra.mxu0 %v638
      %664 = vmatprep.subr.bf16.mxu0 0
      %665 = vmatpush1.bf16.msra.mxu0 %v637
      %666 = vmatprep.subr.bf16.mxu0 0
      %667 = vmatpush1.bf16.msra.mxu0 %v636
      %668 = vmatprep.subr.bf16.mxu0 0
      %669 = vmatpush2.bf16.msra.mxu0 0
      %670 = vmatprep.subr.bf16.mxu0 0
      %671 = vmatpush2.bf16.msra.mxu0 0
      %672 = vmatprep.subr.bf16.mxu0 0
      %673 = vmatpush2.bf16.msra.mxu0 0
      %674 = vmatprep.subr.bf16.mxu0 0
      %675 = vmatpush2.bf16.msra.mxu0 0
      %676 = vmatprep.subr.bf16.mxu0 0
      %677 = vmatpush2.bf16.msra.mxu0 0
      %678 = vmatprep.subr.bf16.mxu0 0
      %679 = vmatpush2.bf16.msra.mxu0 0
      %680 = vmatprep.subr.bf16.mxu0 0
      %681 = vmatpush2.bf16.msra.mxu0 0
      %682 = vmatprep.subr.bf16.mxu0 0
      %683 = vmatpush2.bf16.msra.mxu0 0
      %684 = vmatprep.mubr.bf16.mxu0 0
      %685 = vmatmul.mubr.bf16.gmra.mxu0 %v500
      %v686 = vpop.f32.mrf.mxu0
      %v687 = vadd.f32 0.0, %v686
      %v688 = vpop.f32.mrf.mxu0
      %v689 = vpop.f32.mrf.mxu0
      %v690 = vadd.f32 0.0, %v689
      %v691 = vpop.f32.mrf.mxu0
      %692 = vmatprep.mubr.bf16.mxu0 0
      %693 = vmatmul.mubr.bf16.gmra.mxu0 %v501
      %v694 = vpop.f32.mrf.mxu0
      %v695 = vadd.f32 0.0, %v694
      %v696 = vpop.f32.mrf.mxu0
      %v697 = vpop.f32.mrf.mxu0
      %v698 = vadd.f32 0.0, %v697
      %v699 = vpop.f32.mrf.mxu0
      %700 = vmatprep.mubr.bf16.mxu0 0
      %701 = vmatmul.mubr.bf16.gmra.mxu0 %v502
      %v702 = vpop.f32.mrf.mxu0
      %v703 = vadd.f32 0.0, %v702
      %v704 = vpop.f32.mrf.mxu0
      %v705 = vpop.f32.mrf.mxu0
      %v706 = vadd.f32 0.0, %v705
      %v707 = vpop.f32.mrf.mxu0
      %708 = vmatprep.mubr.bf16.mxu0 0
      %709 = vmatmul.mubr.bf16.gmra.mxu0 %v503
      %v710 = vpop.f32.mrf.mxu0
      %v711 = vadd.f32 0.0, %v710
      %v712 = vpop.f32.mrf.mxu0
      %v713 = vpop.f32.mrf.mxu0
      %v714 = vadd.f32 0.0, %v713
      %v715 = vpop.f32.mrf.mxu0
      %716 = vmatprep.mubr.bf16.mxu0 0
      %717 = vmatmul.mubr.bf16.gmra.mxu0 %v504
      %v718 = vpop.f32.mrf.mxu0
      %v719 = vadd.f32 0.0, %v718
      %v720 = vpop.f32.mrf.mxu0
      %v721 = vpop.f32.mrf.mxu0
      %v722 = vadd.f32 0.0, %v721
      %v723 = vpop.f32.mrf.mxu0
      %724 = vmatprep.mubr.bf16.mxu0 0
      %725 = vmatmul.mubr.bf16.gmra.mxu0 %v505
      %v726 = vpop.f32.mrf.mxu0
      %v727 = vadd.f32 0.0, %v726
      %v728 = vpop.f32.mrf.mxu0
      %v729 = vpop.f32.mrf.mxu0
      %v730 = vadd.f32 0.0, %v729
      %v731 = vpop.f32.mrf.mxu0
      %732 = vmatprep.mubr.bf16.mxu0 0
      %733 = vmatmul.mubr.bf16.gmra.mxu0 %v506
      %v734 = vpop.f32.mrf.mxu0
      %v735 = vadd.f32 0.0, %v734
      %v736 = vpop.f32.mrf.mxu0
      %v737 = vpop.f32.mrf.mxu0
      %v738 = vadd.f32 0.0, %v737
      %v739 = vpop.f32.mrf.mxu0
      %740 = vmatprep.mubr.bf16.mxu0 0
      %741 = vmatmul.mubr.bf16.gmra.mxu0 %v507
      %v742 = vpop.f32.mrf.mxu0
      %v743 = vadd.f32 0.0, %v742
      %v744 = vpop.f32.mrf.mxu0
      %v745 = vpop.f32.mrf.mxu0
      %v746 = vadd.f32 0.0, %v745
      %v747 = vpop.f32.mrf.mxu0
      %748 = vmatprep.mubr.bf16.mxu0 0
      %749 = vmatmul.mubr.bf16.gmra.mxu0 %v508
      %v750 = vpop.f32.mrf.mxu0
      %v751 = vadd.f32 0.0, %v750
      %v752 = vpop.f32.mrf.mxu0
      %v753 = vpop.f32.mrf.mxu0
      %v754 = vadd.f32 0.0, %v753
      %v755 = vpop.f32.mrf.mxu0
      %756 = vmatprep.mubr.bf16.mxu0 0
      %757 = vmatmul.mubr.bf16.gmra.mxu0 %v509
      %v758 = vpop.f32.mrf.mxu0
      %v759 = vadd.f32 0.0, %v758
      %v760 = vpop.f32.mrf.mxu0
      %v761 = vpop.f32.mrf.mxu0
      %v762 = vadd.f32 0.0, %v761
      %v763 = vpop.f32.mrf.mxu0
      %764 = vmatprep.mubr.bf16.mxu0 0
      %765 = vmatmul.mubr.bf16.gmra.mxu0 %v510
      %v766 = vpop.f32.mrf.mxu0
      %v767 = vadd.f32 0.0, %v766
      %v768 = vpop.f32.mrf.mxu0
      %v769 = vpop.f32.mrf.mxu0
      %v770 = vadd.f32 0.0, %v769
      %v771 = vpop.f32.mrf.mxu0
      %772 = vmatprep.mubr.bf16.mxu0 0
      %773 = vmatmul.mubr.bf16.gmra.mxu0 %v511
      %v774 = vpop.f32.mrf.mxu0
      %v775 = vadd.f32 0.0, %v774
      %v776 = vpop.f32.mrf.mxu0
      %v777 = vpop.f32.mrf.mxu0
      %v778 = vadd.f32 0.0, %v777
      %v779 = vpop.f32.mrf.mxu0
      %780 = vmatprep.mubr.bf16.mxu0 0
      %781 = vmatmul.mubr.bf16.gmra.mxu0 %v512
      %v782 = vpop.f32.mrf.mxu0
      %v783 = vadd.f32 0.0, %v782
      %v784 = vpop.f32.mrf.mxu0
      %v785 = vpop.f32.mrf.mxu0
      %v786 = vadd.f32 0.0, %v785
      %v787 = vpop.f32.mrf.mxu0
      %788 = vmatprep.mubr.bf16.mxu0 0
      %789 = vmatmul.mubr.bf16.gmra.mxu0 %v513
      %v790 = vpop.f32.mrf.mxu0
      %v791 = vadd.f32 0.0, %v790
      %v792 = vpop.f32.mrf.mxu0
      %v793 = vpop.f32.mrf.mxu0
      %v794 = vadd.f32 0.0, %v793
      %v795 = vpop.f32.mrf.mxu0
      %796 = vmatprep.mubr.bf16.mxu0 0
      %797 = vmatmul.mubr.bf16.gmra.mxu0 %v514
      %v798 = vpop.f32.mrf.mxu0
      %v799 = vadd.f32 0.0, %v798
      %v800 = vpop.f32.mrf.mxu0
      %v801 = vpop.f32.mrf.mxu0
      %v802 = vadd.f32 0.0, %v801
      %v803 = vpop.f32.mrf.mxu0
      %804 = vmatprep.mubr.bf16.mxu0 0
      %805 = vmatmul.mubr.bf16.gmra.mxu0 %v515
      %v806 = vpop.f32.mrf.mxu0
      %v807 = vadd.f32 0.0, %v806
      %v808 = vpop.f32.mrf.mxu0
      %v809 = vpop.f32.mrf.mxu0
      %v810 = vadd.f32 0.0, %v809
      %v811 = vpop.f32.mrf.mxu0
      %812 = vmatprep.mubr.bf16.mxu0 0
      %813 = vmatmul.mubr.bf16.gmra.mxu0 %v516
      %v814 = vpop.f32.mrf.mxu0
      %v815 = vadd.f32 0.0, %v814
      %v816 = vpop.f32.mrf.mxu0
      %v817 = vpop.f32.mrf.mxu0
      %v818 = vadd.f32 0.0, %v817
      %v819 = vpop.f32.mrf.mxu0
      %820 = vmatprep.mubr.bf16.mxu0 0
      %821 = vmatmul.mubr.bf16.gmra.mxu0 %v517
      %v822 = vpop.f32.mrf.mxu0
      %v823 = vadd.f32 0.0, %v822
      %v824 = vpop.f32.mrf.mxu0
      %v825 = vpop.f32.mrf.mxu0
      %v826 = vadd.f32 0.0, %v825
      %v827 = vpop.f32.mrf.mxu0
      %828 = vmatprep.mubr.bf16.mxu0 0
      %829 = vmatmul.mubr.bf16.gmra.mxu0 %v518
      %v830 = vpop.f32.mrf.mxu0
      %v831 = vadd.f32 0.0, %v830
      %v832 = vpop.f32.mrf.mxu0
      %v833 = vpop.f32.mrf.mxu0
      %v834 = vadd.f32 0.0, %v833
      %v835 = vpop.f32.mrf.mxu0
      %836 = vmatprep.mubr.bf16.mxu0 0
      %837 = vmatmul.mubr.bf16.gmra.mxu0 %v519
      %v838 = vpop.f32.mrf.mxu0
      %v839 = vadd.f32 0.0, %v838
      %v840 = vpop.f32.mrf.mxu0
      %v841 = vpop.f32.mrf.mxu0
      %v842 = vadd.f32 0.0, %v841
      %v843 = vpop.f32.mrf.mxu0
      %844 = vmatprep.mubr.bf16.mxu0 0
      %845 = vmatmul.mubr.bf16.gmra.mxu0 %v520
      %v846 = vpop.f32.mrf.mxu0
      %v847 = vadd.f32 0.0, %v846
      %v848 = vpop.f32.mrf.mxu0
      %v849 = vpop.f32.mrf.mxu0
      %v850 = vadd.f32 0.0, %v849
      %v851 = vpop.f32.mrf.mxu0
      %852 = vmatprep.mubr.bf16.mxu0 0
      %853 = vmatmul.mubr.bf16.gmra.mxu0 %v521
      %v854 = vpop.f32.mrf.mxu0
      %v855 = vadd.f32 0.0, %v854
      %v856 = vpop.f32.mrf.mxu0
      %v857 = vpop.f32.mrf.mxu0
      %v858 = vadd.f32 0.0, %v857
      %v859 = vpop.f32.mrf.mxu0
      %860 = vmatprep.mubr.bf16.mxu0 0
      %861 = vmatmul.mubr.bf16.gmra.mxu0 %v522
      %v862 = vpop.f32.mrf.mxu0
      %v863 = vadd.f32 0.0, %v862
      %v864 = vpop.f32.mrf.mxu0
      %v865 = vpop.f32.mrf.mxu0
      %v866 = vadd.f32 0.0, %v865
      %v867 = vpop.f32.mrf.mxu0
      %868 = vmatprep.mubr.bf16.mxu0 0
      %869 = vmatmul.mubr.bf16.gmra.mxu0 %v523
      %v870 = vpop.f32.mrf.mxu0
      %v871 = vadd.f32 0.0, %v870
      %v872 = vpop.f32.mrf.mxu0
      %v873 = vpop.f32.mrf.mxu0
      %v874 = vadd.f32 0.0, %v873
      %v875 = vpop.f32.mrf.mxu0
      %876 = vmatprep.mubr.bf16.mxu0 0
      %877 = vmatmul.mubr.bf16.gmra.mxu0 %v524
      %v878 = vpop.f32.mrf.mxu0
      %v879 = vadd.f32 0.0, %v878
      %v880 = vpop.f32.mrf.mxu0
      %v881 = vpop.f32.mrf.mxu0
      %v882 = vadd.f32 0.0, %v881
      %v883 = vpop.f32.mrf.mxu0
      %884 = vmatprep.mubr.bf16.mxu0 0
      %885 = vmatmul.mubr.bf16.gmra.mxu0 %v525
      %v886 = vpop.f32.mrf.mxu0
      %v887 = vadd.f32 0.0, %v886
      %v888 = vpop.f32.mrf.mxu0
      %v889 = vpop.f32.mrf.mxu0
      %v890 = vadd.f32 0.0, %v889
      %v891 = vpop.f32.mrf.mxu0
      %892 = vmatprep.mubr.bf16.mxu0 0
      %893 = vmatmul.mubr.bf16.gmra.mxu0 %v526
      %v894 = vpop.f32.mrf.mxu0
      %v895 = vadd.f32 0.0, %v894
      %v896 = vpop.f32.mrf.mxu0
      %v897 = vpop.f32.mrf.mxu0
      %v898 = vadd.f32 0.0, %v897
      %v899 = vpop.f32.mrf.mxu0
      %900 = vmatprep.mubr.bf16.mxu0 0
      %901 = vmatmul.mubr.bf16.gmra.mxu0 %v527
      %v902 = vpop.f32.mrf.mxu0
      %v903 = vadd.f32 0.0, %v902
      %v904 = vpop.f32.mrf.mxu0
      %v905 = vpop.f32.mrf.mxu0
      %v906 = vadd.f32 0.0, %v905
      %v907 = vpop.f32.mrf.mxu0
      %908 = vmatprep.mubr.bf16.mxu0 0
      %909 = vmatmul.mubr.bf16.gmra.mxu0 %v528
      %v910 = vpop.f32.mrf.mxu0
      %v911 = vadd.f32 0.0, %v910
      %v912 = vpop.f32.mrf.mxu0
      %v913 = vpop.f32.mrf.mxu0
      %v914 = vadd.f32 0.0, %v913
      %v915 = vpop.f32.mrf.mxu0
      %916 = vmatprep.mubr.bf16.mxu0 0
      %917 = vmatmul.mubr.bf16.gmra.mxu0 %v529
      %v918 = vpop.f32.mrf.mxu0
      %v919 = vadd.f32 0.0, %v918
      %v920 = vpop.f32.mrf.mxu0
      %v921 = vpop.f32.mrf.mxu0
      %v922 = vadd.f32 0.0, %v921
      %v923 = vpop.f32.mrf.mxu0
      %924 = vmatprep.mubr.bf16.mxu0 0
      %925 = vmatmul.mubr.bf16.gmra.mxu0 %v530
      %v926 = vpop.f32.mrf.mxu0
      %v927 = vadd.f32 0.0, %v926
      %v928 = vpop.f32.mrf.mxu0
      %v929 = vpop.f32.mrf.mxu0
      %v930 = vadd.f32 0.0, %v929
      %v931 = vpop.f32.mrf.mxu0
      %932 = vmatprep.mubr.bf16.mxu0 0
      %933 = vmatmul.mubr.bf16.gmra.mxu0 %v531
      %v934 = vpop.f32.mrf.mxu0
      %v935 = vadd.f32 0.0, %v934
      %v936 = vpop.f32.mrf.mxu0
      %v937 = vpop.f32.mrf.mxu0
      %v938 = vadd.f32 0.0, %v937
      %v939 = vpop.f32.mrf.mxu0
      %940 = vmatprep.mubr.bf16.mxu0 0
      %941 = vmatmul.mubr.bf16.gmra.mxu0 %v532
      %v942 = vpop.f32.mrf.mxu0
      %v943 = vadd.f32 0.0, %v942
      %v944 = vpop.f32.mrf.mxu0
      %v945 = vpop.f32.mrf.mxu0
      %v946 = vadd.f32 0.0, %v945
      %v947 = vpop.f32.mrf.mxu0
      %948 = vmatprep.mubr.bf16.mxu0 0
      %949 = vmatmul.mubr.bf16.gmra.mxu0 %v533
      %v950 = vpop.f32.mrf.mxu0
      %v951 = vadd.f32 0.0, %v950
      %v952 = vpop.f32.mrf.mxu0
      %v953 = vpop.f32.mrf.mxu0
      %v954 = vadd.f32 0.0, %v953
      %v955 = vpop.f32.mrf.mxu0
      %956 = vmatprep.mubr.bf16.mxu0 0
      %957 = vmatmul.mubr.bf16.gmra.mxu0 %v534
      %v958 = vpop.f32.mrf.mxu0
      %v959 = vadd.f32 0.0, %v958
      %v960 = vpop.f32.mrf.mxu0
      %v961 = vpop.f32.mrf.mxu0
      %v962 = vadd.f32 0.0, %v961
      %v963 = vpop.f32.mrf.mxu0
      %964 = vmatprep.mubr.bf16.mxu0 0
      %965 = vmatmul.mubr.bf16.gmra.mxu0 %v535
      %v966 = vpop.f32.mrf.mxu0
      %v967 = vadd.f32 0.0, %v966
      %v968 = vpop.f32.mrf.mxu0
      %v969 = vpop.f32.mrf.mxu0
      %v970 = vadd.f32 0.0, %v969
      %v971 = vpop.f32.mrf.mxu0
      %972 = vmatprep.mubr.bf16.mxu0 0
      %973 = vmatmul.mubr.bf16.gmra.mxu0 %v536
      %v974 = vpop.f32.mrf.mxu0
      %v975 = vadd.f32 0.0, %v974
      %v976 = vpop.f32.mrf.mxu0
      %v977 = vpop.f32.mrf.mxu0
      %v978 = vadd.f32 0.0, %v977
      %v979 = vpop.f32.mrf.mxu0
      %980 = vmatprep.mubr.bf16.mxu0 0
      %981 = vmatmul.mubr.bf16.gmra.mxu0 %v537
      %v982 = vpop.f32.mrf.mxu0
      %v983 = vadd.f32 0.0, %v982
      %v984 = vpop.f32.mrf.mxu0
      %v985 = vpop.f32.mrf.mxu0
      %v986 = vadd.f32 0.0, %v985
      %v987 = vpop.f32.mrf.mxu0
      %988 = vmatprep.mubr.bf16.mxu0 0
      %989 = vmatmul.mubr.bf16.gmra.mxu0 %v538
      %v990 = vpop.f32.mrf.mxu0
      %v991 = vadd.f32 0.0, %v990
      %v992 = vpop.f32.mrf.mxu0
      %v993 = vpop.f32.mrf.mxu0
      %v994 = vadd.f32 0.0, %v993
      %v995 = vpop.f32.mrf.mxu0
      %996 = vmatprep.mubr.bf16.mxu0 0
      %997 = vmatmul.mubr.bf16.gmra.mxu0 %v539
      %v998 = vpop.f32.mrf.mxu0
      %v999 = vadd.f32 0.0, %v998
      %v1000 = vpop.f32.mrf.mxu0
      %v1001 = vpop.f32.mrf.mxu0
      %v1002 = vadd.f32 0.0, %v1001
      %v1003 = vpop.f32.mrf.mxu0
      %1004 = vmatprep.mubr.bf16.mxu0 0
      %1005 = vmatmul.mubr.bf16.gmra.mxu0 %v540
      %v1006 = vpop.f32.mrf.mxu0
      %v1007 = vadd.f32 0.0, %v1006
      %v1008 = vpop.f32.mrf.mxu0
      %v1009 = vpop.f32.mrf.mxu0
      %v1010 = vadd.f32 0.0, %v1009
      %v1011 = vpop.f32.mrf.mxu0
      %1012 = vmatprep.mubr.bf16.mxu0 0
      %1013 = vmatmul.mubr.bf16.gmra.mxu0 %v541
      %v1014 = vpop.f32.mrf.mxu0
      %v1015 = vadd.f32 0.0, %v1014
      %v1016 = vpop.f32.mrf.mxu0
      %v1017 = vpop.f32.mrf.mxu0
      %v1018 = vadd.f32 0.0, %v1017
      %v1019 = vpop.f32.mrf.mxu0
      %1020 = vmatprep.mubr.bf16.mxu0 0
      %1021 = vmatmul.mubr.bf16.gmra.mxu0 %v542
      %v1022 = vpop.f32.mrf.mxu0
      %v1023 = vadd.f32 0.0, %v1022
      %v1024 = vpop.f32.mrf.mxu0
      %v1025 = vpop.f32.mrf.mxu0
      %v1026 = vadd.f32 0.0, %v1025
      %v1027 = vpop.f32.mrf.mxu0
      %1028 = vmatprep.mubr.bf16.mxu0 0
      %1029 = vmatmul.mubr.bf16.gmra.mxu0 %v543
      %v1030 = vpop.f32.mrf.mxu0
      %v1031 = vadd.f32 0.0, %v1030
      %v1032 = vpop.f32.mrf.mxu0
      %v1033 = vpop.f32.mrf.mxu0
      %v1034 = vadd.f32 0.0, %v1033
      %v1035 = vpop.f32.mrf.mxu0
      %1036 = vmatprep.mubr.bf16.mxu0 0
      %1037 = vmatmul.mubr.bf16.gmra.mxu0 %v544
      %v1038 = vpop.f32.mrf.mxu0
      %v1039 = vadd.f32 0.0, %v1038
      %v1040 = vpop.f32.mrf.mxu0
      %v1041 = vpop.f32.mrf.mxu0
      %v1042 = vadd.f32 0.0, %v1041
      %v1043 = vpop.f32.mrf.mxu0
      %1044 = vmatprep.mubr.bf16.mxu0 0
      %1045 = vmatmul.mubr.bf16.gmra.mxu0 %v545
      %v1046 = vpop.f32.mrf.mxu0
      %v1047 = vadd.f32 0.0, %v1046
      %v1048 = vpop.f32.mrf.mxu0
      %v1049 = vpop.f32.mrf.mxu0
      %v1050 = vadd.f32 0.0, %v1049
      %v1051 = vpop.f32.mrf.mxu0
      %1052 = vmatprep.mubr.bf16.mxu0 0
      %1053 = vmatmul.mubr.bf16.gmra.mxu0 %v546
      %v1054 = vpop.f32.mrf.mxu0
      %v1055 = vadd.f32 0.0, %v1054
      %v1056 = vpop.f32.mrf.mxu0
      %v1057 = vpop.f32.mrf.mxu0
      %v1058 = vadd.f32 0.0, %v1057
      %v1059 = vpop.f32.mrf.mxu0
      %1060 = vmatprep.mubr.bf16.mxu0 0
      %1061 = vmatmul.mubr.bf16.gmra.mxu0 %v547
      %v1062 = vpop.f32.mrf.mxu0
      %v1063 = vadd.f32 0.0, %v1062
      %v1064 = vpop.f32.mrf.mxu0
      %v1065 = vpop.f32.mrf.mxu0
      %v1066 = vadd.f32 0.0, %v1065
      %v1067 = vpop.f32.mrf.mxu0
      %1068 = vmatprep.mubr.bf16.mxu0 0
      %1069 = vmatmul.mubr.bf16.gmra.mxu0 %v548
      %v1070 = vpop.f32.mrf.mxu0
      %v1071 = vadd.f32 0.0, %v1070
      %v1072 = vpop.f32.mrf.mxu0
      %v1073 = vpop.f32.mrf.mxu0
      %v1074 = vadd.f32 0.0, %v1073
      %v1075 = vpop.f32.mrf.mxu0
      %1076 = vmatprep.mubr.bf16.mxu0 0
      %1077 = vmatmul.mubr.bf16.gmra.mxu0 %v549
      %v1078 = vpop.f32.mrf.mxu0
      %v1079 = vadd.f32 0.0, %v1078
      %v1080 = vpop.f32.mrf.mxu0
      %v1081 = vpop.f32.mrf.mxu0
      %v1082 = vadd.f32 0.0, %v1081
      %v1083 = vpop.f32.mrf.mxu0
      %1084 = vmatprep.mubr.bf16.mxu0 0
      %1085 = vmatmul.mubr.bf16.gmra.mxu0 %v550
      %v1086 = vpop.f32.mrf.mxu0
      %v1087 = vadd.f32 0.0, %v1086
      %v1088 = vpop.f32.mrf.mxu0
      %v1089 = vpop.f32.mrf.mxu0
      %v1090 = vadd.f32 0.0, %v1089
      %v1091 = vpop.f32.mrf.mxu0
      %1092 = vmatprep.mubr.bf16.mxu0 0
      %1093 = vmatmul.mubr.bf16.gmra.mxu0 %v551
      %v1094 = vpop.f32.mrf.mxu0
      %v1095 = vadd.f32 0.0, %v1094
      %v1096 = vpop.f32.mrf.mxu0
      %v1097 = vpop.f32.mrf.mxu0
      %v1098 = vadd.f32 0.0, %v1097
      %v1099 = vpop.f32.mrf.mxu0
      %1100 = vdwg.mxu0
      %v1101 = vmax.f32 %v687, %v791
      %v1102 = vmax.f32 %v690, %v794
      %v1103 = vmax.f32 %v695, %v799
      %v1104 = vmax.f32 %v698, %v802
      %v1105 = vmax.f32 %v703, %v807
      %v1106 = vmax.f32 %v706, %v810
      %v1107 = vmax.f32 %v711, %v815
      %v1108 = vmax.f32 %v714, %v818
      %v1109 = vmax.f32 %v719, %v823
      %v1110 = vmax.f32 %v722, %v826
      %v1111 = vmax.f32 %v727, %v831
      %v1112 = vmax.f32 %v730, %v834
      %v1113 = vmax.f32 %v735, %v839
      %v1114 = vmax.f32 %v738, %v842
      %v1115 = vmax.f32 %v743, %v847
      %v1116 = vmax.f32 %v746, %v850
      %v1117 = vmax.f32 %v751, %v855
      %v1118 = vmax.f32 %v754, %v858
      %v1119 = vmax.f32 %v759, %v863
      %v1120 = vmax.f32 %v762, %v866
      %v1121 = vmax.f32 %v767, %v871
      %v1122 = vmax.f32 %v770, %v874
      %v1123 = vmax.f32 %v775, %v879
      %v1124 = vmax.f32 %v778, %v882
      %v1125 = vmax.f32 %v783, %v887
      %v1126 = vmax.f32 %v786, %v890
      %v1127 = vmax.f32 %v895, %v999
      %v1128 = vmax.f32 %v898, %v1002
      %v1129 = vmax.f32 %v903, %v1007
      %v1130 = vmax.f32 %v906, %v1010
      %v1131 = vmax.f32 %v911, %v1015
      %v1132 = vmax.f32 %v914, %v1018
      %v1133 = vmax.f32 %v919, %v1023
      %v1134 = vmax.f32 %v922, %v1026
      %v1135 = vmax.f32 %v927, %v1031
      %v1136 = vmax.f32 %v930, %v1034
      %v1137 = vmax.f32 %v935, %v1039
      %v1138 = vmax.f32 %v938, %v1042
      %v1139 = vmax.f32 %v943, %v1047
      %v1140 = vmax.f32 %v946, %v1050
      %v1141 = vmax.f32 %v951, %v1055
      %v1142 = vmax.f32 %v954, %v1058
      %v1143 = vmax.f32 %v959, %v1063
      %v1144 = vmax.f32 %v962, %v1066
      %v1145 = vmax.f32 %v967, %v1071
      %v1146 = vmax.f32 %v970, %v1074
      %v1147 = vmax.f32 %v975, %v1079
      %v1148 = vmax.f32 %v978, %v1082
      %v1149 = vmax.f32 %v983, %v1087
      %v1150 = vmax.f32 %v986, %v1090
      %v1151 = vmax.f32 %v991, %v1095
      %v1152 = vmax.f32 %v994, %v1098
      %v1153 = vmax.f32 %v1101, %v1127
      %v1154 = vmax.f32 %v1102, %v1128
      %v1155 = vmax.f32 %v1103, %v1129
      %v1156 = vmax.f32 %v1104, %v1130
      %v1157 = vmax.f32 %v1105, %v1131
      %v1158 = vmax.f32 %v1106, %v1132
      %v1159 = vmax.f32 %v1107, %v1133
      %v1160 = vmax.f32 %v1108, %v1134
      %v1161 = vmax.f32 %v1109, %v1135
      %v1162 = vmax.f32 %v1110, %v1136
      %v1163 = vmax.f32 %v1111, %v1137
      %v1164 = vmax.f32 %v1112, %v1138
      %v1165 = vmax.f32 %v1113, %v1139
      %v1166 = vmax.f32 %v1114, %v1140
      %v1167 = vmax.f32 %v1115, %v1141
      %v1168 = vmax.f32 %v1116, %v1142
      %v1169 = vmax.f32 %v1117, %v1143
      %v1170 = vmax.f32 %v1118, %v1144
      %v1171 = vmax.f32 %v1119, %v1145
      %v1172 = vmax.f32 %v1120, %v1146
      %v1173 = vmax.f32 %v1121, %v1147
      %v1174 = vmax.f32 %v1122, %v1148
      %v1175 = vmax.f32 %v1123, %v1149
      %v1176 = vmax.f32 %v1124, %v1150
      %v1177 = vmax.f32 %v1125, %v1151
      %v1178 = vmax.f32 %v1126, %v1152
      %v1179 = vld [vmem:[%s2] sm:$0x1]
      %v1181 = vlaneseq
      %v1182 = vshrl.u32 %v1181, 7
      %v1183 = vsub.s32 0, %v1182
      %v1184 = vrot.slane %v1179, %v1183
      %v1186 = vadd.f32 %v1153, %v1184
      %v1187 = vadd.f32 %v1154, %v1184
      %v1188 = vadd.f32 %v1155, %v1184
      %v1189 = vadd.f32 %v1156, %v1184
      %v1190 = vadd.f32 %v1157, %v1184
      %v1191 = vadd.f32 %v1158, %v1184
      %v1192 = vadd.f32 %v1159, %v1184
      %v1193 = vadd.f32 %v1160, %v1184
      %v1194 = vadd.f32 %v1161, %v1184
      %v1195 = vadd.f32 %v1162, %v1184
      %v1196 = vadd.f32 %v1163, %v1184
      %v1197 = vadd.f32 %v1164, %v1184
      %v1198 = vadd.f32 %v1165, %v1184
      %v1199 = vadd.f32 %v1166, %v1184
      %v1200 = vadd.f32 %v1167, %v1184
      %v1201 = vadd.f32 %v1168, %v1184
      %v1202 = vadd.f32 %v1169, %v1184
      %v1203 = vadd.f32 %v1170, %v1184
      %v1204 = vadd.f32 %v1171, %v1184
      %v1205 = vadd.f32 %v1172, %v1184
      %v1206 = vadd.f32 %v1173, %v1184
      %v1207 = vadd.f32 %v1174, %v1184
      %v1208 = vadd.f32 %v1175, %v1184
      %v1209 = vadd.f32 %v1176, %v1184
      %v1210 = vadd.f32 %v1177, %v1184
      %v1211 = vadd.f32 %v1178, %v1184
      %v1212 = vmax.f32 %v1186, 0.0
      %v1213 = vmax.f32 %v1187, 0.0
      %v1214 = vmax.f32 %v1188, 0.0
      %v1215 = vmax.f32 %v1189, 0.0
      %v1216 = vmax.f32 %v1190, 0.0
      %v1217 = vmax.f32 %v1191, 0.0
      %v1218 = vmax.f32 %v1192, 0.0
      %v1219 = vmax.f32 %v1193, 0.0
      %v1220 = vmax.f32 %v1194, 0.0
      %v1221 = vmax.f32 %v1195, 0.0
      %v1222 = vmax.f32 %v1196, 0.0
      %v1223 = vmax.f32 %v1197, 0.0
      %v1224 = vmax.f32 %v1198, 0.0
      %v1225 = vmax.f32 %v1199, 0.0
      %v1226 = vmax.f32 %v1200, 0.0
      %v1227 = vmax.f32 %v1201, 0.0
      %v1228 = vmax.f32 %v1202, 0.0
      %v1229 = vmax.f32 %v1203, 0.0
      %v1230 = vmax.f32 %v1204, 0.0
      %v1231 = vmax.f32 %v1205, 0.0
      %v1232 = vmax.f32 %v1206, 0.0
      %v1233 = vmax.f32 %v1207, 0.0
      %v1234 = vmax.f32 %v1208, 0.0
      %v1235 = vmax.f32 %v1209, 0.0
      %v1236 = vmax.f32 %v1210, 0.0
      %v1237 = vmax.f32 %v1211, 0.0
      %v1238 = vpack.c.bf16 %v1213, %v1212
      %v1239 = vpack.c.bf16 %v1215, %v1214
      %v1240 = vpack.c.bf16 %v1217, %v1216
      %v1241 = vpack.c.bf16 %v1219, %v1218
      %v1242 = vpack.c.bf16 %v1221, %v1220
      %v1243 = vpack.c.bf16 %v1223, %v1222
      %v1244 = vpack.c.bf16 %v1225, %v1224
      %v1245 = vpack.c.bf16 %v1227, %v1226
      %v1246 = vpack.c.bf16 %v1229, %v1228
      %v1247 = vpack.c.bf16 %v1231, %v1230
      %v1248 = vpack.c.bf16 %v1233, %v1232
      %v1249 = vpack.c.bf16 %v1235, %v1234
      %v1250 = vpack.c.bf16 %v1237, %v1236
      %v1264 = vunpack.c.l.b16 %v1238
      %v1265 = vunpack.c.h.b16 %v1238
      %v1266 = vunpack.c.l.b16 %v1239
      %v1267 = vunpack.c.h.b16 %v1239
      %v1268 = vunpack.c.l.b16 %v1240
      %v1269 = vunpack.c.h.b16 %v1240
      %v1270 = vunpack.c.l.b16 %v1241
      %v1271 = vunpack.c.h.b16 %v1241
      %v1272 = vunpack.c.l.b16 %v1242
      %v1273 = vunpack.c.h.b16 %v1242
      %v1274 = vunpack.c.l.b16 %v1243
      %v1275 = vunpack.c.h.b16 %v1243
      %v1276 = vunpack.c.l.b16 %v1244
      %v1277 = vunpack.c.h.b16 %v1244
      %v1278 = vunpack.c.l.b16 %v1245
      %v1279 = vunpack.c.h.b16 %v1245
      %v1280 = vunpack.c.l.b16 %v1246
      %v1281 = vunpack.c.h.b16 %v1246
      %v1282 = vunpack.c.l.b16 %v1247
      %v1283 = vunpack.c.h.b16 %v1247
      %v1284 = vunpack.c.l.b16 %v1248
      %v1285 = vunpack.c.h.b16 %v1248
      %v1286 = vunpack.c.l.b16 %v1249
      %v1287 = vunpack.c.h.b16 %v1249
      %v1288 = vunpack.c.l.b16 %v1250
      %v1289 = vunpack.c.h.b16 %v1250
      %v1290 = vpack.c.b16 %v1264, %v1264
      %v1291 = vpack.c.b16 %v1265, %v1265
      %v1292 = vpack.c.b16 %v1266, %v1266
      %v1293 = vpack.c.b16 %v1267, %v1267
      %v1294 = vpack.c.b16 %v1268, %v1268
      %v1295 = vpack.c.b16 %v1269, %v1269
      %v1296 = vpack.c.b16 %v1270, %v1270
      %v1297 = vpack.c.b16 %v1271, %v1271
      %v1298 = vpack.c.b16 %v1272, %v1272
      %v1299 = vpack.c.b16 %v1273, %v1273
      %v1300 = vpack.c.b16 %v1274, %v1274
      %v1301 = vpack.c.b16 %v1275, %v1275
      %v1302 = vpack.c.b16 %v1276, %v1276
      %v1303 = vpack.c.b16 %v1277, %v1277
      %v1304 = vpack.c.b16 %v1278, %v1278
      %v1305 = vpack.c.b16 %v1279, %v1279
      %v1306 = vpack.c.b16 %v1280, %v1280
      %v1307 = vpack.c.b16 %v1281, %v1281
      %v1308 = vpack.c.b16 %v1282, %v1282
      %v1309 = vpack.c.b16 %v1283, %v1283
      %v1310 = vpack.c.b16 %v1284, %v1284
      %v1311 = vpack.c.b16 %v1285, %v1285
      %v1312 = vpack.c.b16 %v1286, %v1286
      %v1313 = vpack.c.b16 %v1287, %v1287
      %v1314 = vpack.c.b16 %v1288, %v1288
      %v1315 = vpack.c.b16 %v1289, %v1289
      %1342 = vst [vmem:[%s170] sm:$0xf] %v1290
      %1343 = vst [vmem:[%s170 + $0x4] sm:$0xf] %v1291
      %1344 = vst [vmem:[%s170 + $0x8] sm:$0xf] %v1292
      %1345 = vst [vmem:[%s170 + $0xc] sm:$0xf] %v1293
      %1346 = vst [vmem:[%s170 + $0x10] sm:$0xf] %v1294
      %1347 = vst [vmem:[%s170 + $0x14] sm:$0xf] %v1295
      %1348 = vst [vmem:[%s170 + $0x18] sm:$0xf] %v1296
      %1349 = vst [vmem:[%s170 + $0x1c] sm:$0xf] %v1297
      %1350 = vst [vmem:[%s170 + $0x20] sm:$0xf] %v1298
      %1351 = vst [vmem:[%s170 + $0x24] sm:$0xf] %v1299
      %1352 = vst [vmem:[%s170 + $0x28] sm:$0xf] %v1300
      %1353 = vst [vmem:[%s170 + $0x2c] sm:$0xf] %v1301
      %1354 = vst [vmem:[%s170 + $0x30] sm:$0xf] %v1302
      %1355 = vst [vmem:[%s170 + $0x34] sm:$0xf] %v1303
      %1356 = vst [vmem:[%s170 + $0x38] sm:$0xf] %v1304
      %1357 = vst [vmem:[%s170 + $0x3c] sm:$0xf] %v1305
      %1358 = vst [vmem:[%s170 + $0x40] sm:$0xf] %v1306
      %1359 = vst [vmem:[%s170 + $0x44] sm:$0xf] %v1307
      %1360 = vst [vmem:[%s170 + $0x48] sm:$0xf] %v1308
      %1361 = vst [vmem:[%s170 + $0x4c] sm:$0xf] %v1309
      %1362 = vst [vmem:[%s170 + $0x50] sm:$0xf] %v1310
      %1363 = vst [vmem:[%s170 + $0x54] sm:$0xf] %v1311
      %1364 = vst [vmem:[%s170 + $0x58] sm:$0xf] %v1312
      %1365 = vst [vmem:[%s170 + $0x5c] sm:$0xf] %v1313
      %1366 = vst [vmem:[%s170 + $0x60] sm:$0xf] %v1314
      %1367 = vst [vmem:[%s170 + $0x64] sm:$0xf] %v1315
      %p1368 = scmp.lt.s32.totalorder %s14, 1
      %s1369 = scalar_select %p1368, %s14, 1
      %s1370 = smul.addr %s1369, 26
      %s1371 = smul.addr %s1370, 4
      %s1372 = scalar_lea.vmem %s3, %s1371
      // Predicated region
      $region33: #{cnn_forward.3} parent=31 // pred_check
        %p1373 = pneg %p100
      $region34: #{cnn_forward.3} parent=31 // pred_check_branch
        %1375 = sbr.rel (%p1373) target = $region36
      $region35: #{cnn_forward.3} parent=31 // pred_region
        _
      $region36: #{cnn_forward.3} parent=31 // pred_fallthru
        _
    $region32: #{cnn_forward.3} parent=5 // pred_fallthru
      _
    %p1376 = scmp.le.s32.totalorder 2, %s9
    // Predicated region
    $region37: #{cnn_forward.3} parent=5 // pred_check
      %p1377 = pneg %p1376
    $region38: #{cnn_forward.3} parent=5 // pred_check_branch
      %1379 = sbr.rel (%p1377) target = $region40
    $region39: #{cnn_forward.3} parent=5 // pred_region
      %s1380 = ssub.s32 %s9, 2
      // Predicated region
      $region41: #{cnn_forward.3} parent=39 // pred_check
        %p1381 = pneg %p106
      $region42: #{cnn_forward.3} parent=39 // pred_check_branch
        %1383 = sbr.rel (%p1381) target = $region44
      $region43: #{cnn_forward.3} parent=39 // pred_region
        %p1384 = scmp.lt.s32.totalorder %s15, 1
        %s1385 = scalar_select %p1384, %s15, 1
        %s1386 = smul.addr %s1385, 26
        %s1387 = smul.addr %s1386, 4
        %s1388 = scalar_lea.vmem %s3, %s1387
      $region44: #{cnn_forward.3} parent=39 // pred_fallthru
        _
    $region40: #{cnn_forward.3} parent=5 // pred_fallthru
      _
  $region6: #{cnn_forward.3} parent=0 // loop_footer
    %s13 = sadd.s32 1, %s9
  $region7: #{cnn_forward.3} parent=0 // loop_footer_branch
    %8 = sbr.rel target = $region3
  $region8: #{cnn_forward.3} parent=0 // loop_exit
    _

// kernel: cnn_forward.4
$region0: #{cnn_forward.4}
  #allocation0 [shape = 'u32[]', space=smem, size = 0x4, offset = 0x4, fixed_abs, tag = 'smem constant byte address 0x4 - core index']
  #allocation1 [shape = 'u32[144,128]{1,0:T(1,128)}', space=vmem, size = 0x12000, scoped, tag = 'internal scratch']
  %s0 = inlined_call_operand.vmem [shape: bf16[2,4,32,256], index: 0, kind: input, shape index: {}]
  %s1 = inlined_call_operand.vmem [shape: bf16[256,128], index: 1, kind: input, shape index: {}]
  %s2 = inlined_call_operand.vmem [shape: f32[1,128], index: 2, kind: input, shape index: {}]
  %s3 = inlined_call_operand.vmem [shape: bf16[2,32,128], index: 3, kind: output, shape index: {}]
  %s4 = sld [smem:[#allocation0]]
  $region45: #{cnn_forward.4} parent=0
    _
  %s6 = ssub.s32 1, %s4
  %s7 = scalar_select 0, %s6, %s4
  loop: start=0, step=1, limit=4
  $region2: #{cnn_forward.4} parent=0 // loop_pre_header
    _
  $region3: #{cnn_forward.4} parent=0 // loop_header
    %s9 = sphi 0, %s13
    %p10 = scmp.ge.s32.totalorder %s9, 4
    %s19 = sphi 0, %s21
    %s22 = sphi 0, %s19
    %s23 = sphi 0, %s22
    %s39 = sphi 0, %s23
    %s43 = sphi 0, %s43
    %s45 = sphi 0, %s43
    %s46 = sphi 0, %s45
    %s60 = sphi 0, %s46
    %s64 = sphi 0, %s64
    %s66 = sphi 0, %s64
    %s67 = sphi 0, %s66
    %s81 = sphi 0, %s67
    %s87 = sphi 0, %s89
    %s90 = sphi 0, %s87
    %s91 = sphi 0, %s90
    %s107 = sphi 0, %s91
  $region4: #{cnn_forward.4} parent=0 // loop_header_branch
    %12 = sbr.rel (%p10) target = $region8
  $region5: #{cnn_forward.4} parent=0 // loop_body
    %s14 = ssub.s32 %s9, 1
    %s15 = ssub.s32 %s9, 2
    %s16 = sadd.s32 %s9, 1
    %s17 = ssub.s32 %s9, %s16
    %p18 = scmp.eq.s32.totalorder %s17, 0
    %s20 = sadd.s32 %s19, 1
    %s21 = scalar_select %p18, %s19, %s20
    %p24 = pneg %p18
    %p25 = scmp.eq.s32.totalorder %s9, 1
    %p26 = por %p24, %p25
    %p27 = scmp.ne.s32.totalorder %s19, %s22
    %p28 = scmp.eq.s32.totalorder %s9, 0
    %p29 = por %p27, %p28
    %p30 = scmp.ne.s32.totalorder %s19, %s22
    %p31 = scmp.eq.s32.totalorder %s14, 1
    %p32 = por %p30, %p31
    %p33 = scmp.ne.s32.totalorder %s22, %s23
    %p34 = scmp.eq.s32.totalorder %s14, 0
    %p35 = por %p33, %p34
    %p36 = scmp.ne.s32.totalorder %s22, %s23
    %p37 = scmp.eq.s32.totalorder %s15, 1
    %p38 = por %p36, %p37
    %p40 = scmp.ne.s32.totalorder %s23, %s39
    %p41 = scmp.eq.s32.totalorder %s15, 0
    %p42 = por %p40, %p41
    %s44 = sadd.s32 %s43, 1
    %p47 = scmp.eq.s32.totalorder %s9, 1
    %p48 = scmp.ne.s32.totalorder %s43, %s45
    %p49 = scmp.eq.s32.totalorder %s9, 0
    %p50 = por %p48, %p49
    %p51 = scmp.ne.s32.totalorder %s43, %s45
    %p52 = scmp.eq.s32.totalorder %s14, 1
    %p53 = por %p51, %p52
    %p54 = scmp.ne.s32.totalorder %s45, %s46
    %p55 = scmp.eq.s32.totalorder %s14, 0
    %p56 = por %p54, %p55
    %p57 = scmp.ne.s32.totalorder %s45, %s46
    %p58 = scmp.eq.s32.totalorder %s15, 1
    %p59 = por %p57, %p58
    %p61 = scmp.ne.s32.totalorder %s46, %s60
    %p62 = scmp.eq.s32.totalorder %s15, 0
    %p63 = por %p61, %p62
    %s65 = sadd.s32 %s64, 1
    %p68 = scmp.eq.s32.totalorder %s9, 1
    %p69 = scmp.ne.s32.totalorder %s64, %s66
    %p70 = scmp.eq.s32.totalorder %s9, 0
    %p71 = por %p69, %p70
    %p72 = scmp.ne.s32.totalorder %s64, %s66
    %p73 = scmp.eq.s32.totalorder %s14, 1
    %p74 = por %p72, %p73
    %p75 = scmp.ne.s32.totalorder %s66, %s67
    %p76 = scmp.eq.s32.totalorder %s14, 0
    %p77 = por %p75, %p76
    %p78 = scmp.ne.s32.totalorder %s66, %s67
    %p79 = scmp.eq.s32.totalorder %s15, 1
    %p80 = por %p78, %p79
    %p82 = scmp.ne.s32.totalorder %s67, %s81
    %p83 = scmp.eq.s32.totalorder %s15, 0
    %p84 = por %p82, %p83
    %s85 = ssub.s32 %s9, %s16
    %p86 = scmp.eq.s32.totalorder %s85, 0
    %s88 = sadd.s32 %s87, 1
    %s89 = scalar_select %p86, %s87, %s88
    %p92 = pneg %p86
    %p93 = scmp.eq.s32.totalorder %s9, 1
    %p94 = por %p92, %p93
    %p95 = scmp.ne.s32.totalorder %s87, %s90
    %p96 = scmp.eq.s32.totalorder %s9, 0
    %p97 = por %p95, %p96
    %p98 = scmp.ne.s32.totalorder %s87, %s90
    %p99 = scmp.eq.s32.totalorder %s14, 1
    %p100 = por %p98, %p99
    %p101 = scmp.ne.s32.totalorder %s90, %s91
    %p102 = scmp.eq.s32.totalorder %s14, 0
    %p103 = por %p101, %p102
    %p104 = scmp.ne.s32.totalorder %s90, %s91
    %p105 = scmp.eq.s32.totalorder %s15, 1
    %p106 = por %p104, %p105
    %p108 = scmp.ne.s32.totalorder %s91, %s107
    %p109 = scmp.eq.s32.totalorder %s15, 0
    %p110 = por %p108, %p109
    %p111 = scmp.le.s32.totalorder 1, %s9
    %p112 = scmp.lt.s32.totalorder %s9, 3
    %p113 = pnand %p111, %p112
    %p114 = pneg %p113
    // Predicated region
    $region9: #{cnn_forward.4} parent=5 // pred_check
      _
    $region10: #{cnn_forward.4} parent=5 // pred_check_branch
      %116 = sbr.rel (%p113) target = $region12
    $region11: #{cnn_forward.4} parent=5 // pred_region
      %s117 = ssub.s32 %s9, 1
      // Predicated region
      $region13: #{cnn_forward.4} parent=11 // pred_check
        %p118 = pneg %p56
      $region14: #{cnn_forward.4} parent=11 // pred_check_branch
        %120 = sbr.rel (%p118) target = $region16
      $region15: #{cnn_forward.4} parent=11 // pred_region
        _
      $region16: #{cnn_forward.4} parent=11 // pred_fallthru
        _
      // Predicated region
      $region17: #{cnn_forward.4} parent=11 // pred_check
        %p121 = pneg %p77
      $region18: #{cnn_forward.4} parent=11 // pred_check_branch
        %123 = sbr.rel (%p121) target = $region20
      $region19: #{cnn_forward.4} parent=11 // pred_region
        _
      $region20: #{cnn_forward.4} parent=11 // pred_fallthru
        _
    $region12: #{cnn_forward.4} parent=5 // pred_fallthru
      _
    %p124 = scmp.lt.s32.totalorder %s9, 2
    // Predicated region
    $region21: #{cnn_forward.4} parent=5 // pred_check
      %p125 = pneg %p124
    $region22: #{cnn_forward.4} parent=5 // pred_check_branch
      %127 = sbr.rel (%p125) target = $region24
    $region23: #{cnn_forward.4} parent=5 // pred_region
      // Predicated region
      $region25: #{cnn_forward.4} parent=23 // pred_check
        %p128 = pneg %p29
      $region26: #{cnn_forward.4} parent=23 // pred_check_branch
        %130 = sbr.rel (%p128) target = $region28
      $region27: #{cnn_forward.4} parent=23 // pred_region
        %p131 = scmp.lt.s32.totalorder %s9, 1
        %s132 = scalar_select %p131, %s9, 1
        %s133 = smul.addr %s132, 32
        %s134 = smul.addr %s133, 4
        %s135 = scalar_lea.vmem %s0, %s134
      $region28: #{cnn_forward.4} parent=23 // pred_fallthru
        _
    $region24: #{cnn_forward.4} parent=5 // pred_fallthru
      _
    %p136 = scmp.le.s32.totalorder 1, %s9
    %p137 = scmp.lt.s32.totalorder %s9, 3
    %p138 = pnand %p136, %p137
    %p139 = pneg %p138
    // Predicated region
    $region29: #{cnn_forward.4} parent=5 // pred_check
      _
    $region30: #{cnn_forward.4} parent=5 // pred_check_branch
      %141 = sbr.rel (%p138) target = $region32
    $region31: #{cnn_forward.4} parent=5 // pred_region
      %s142 = ssub.s32 %s9, 1
      %p143 = scmp.lt.s32.totalorder %s14, 1
      %s144 = scalar_select %p143, %s14, 1
      %s145 = smul.addr %s144, 32
      %s146 = smul.addr %s145, 4
      %s147 = scalar_lea.vmem %s0, %s146
      %p148 = pneg %p35
      %p149 = pneg %p32
      %p150 = pneg %p56
      %p151 = pneg %p53
      %p152 = pneg %p77
      %p153 = pneg %p74
      %p154 = pneg %p103
      %p155 = pneg %p100
      %p156 = scmp.lt.s32.totalorder %s14, 1
      %s157 = scalar_select %p156, %s14, 1
      %s158 = smul.addr %s157, 4
      %s159 = smul.addr %s158, 4
      %s160 = scalar_lea.vmem %s3, %s159
      %p161 = scmp.lt.s32.totalorder %s14, 1
      %s162 = scalar_select %p161, %s14, 1
      %s163 = smul.addr %s162, 32
      %s164 = smul.addr %s163, 4
      %s165 = scalar_lea.vmem %s0, %s164
      %p166 = scmp.lt.s32.totalorder %s14, 1
      %s167 = scalar_select %p166, %s14, 1
      %s168 = smul.addr %s167, 4
      %s169 = smul.addr %s168, 4
      %s170 = scalar_lea.vmem %s3, %s169
      %v172 = vld [vmem:[%s165] sm:$0xff]
      %v173 = vld [vmem:[%s165 + $0x8] sm:$0xff]
      %v174 = vld [vmem:[%s165 + $0x10] sm:$0xff]
      %v175 = vld [vmem:[%s165 + $0x18] sm:$0xff]
      %v176 = vld [vmem:[%s165 + $0x20] sm:$0xff]
      %v177 = vld [vmem:[%s165 + $0x28] sm:$0xff]
      %v178 = vld [vmem:[%s165 + $0x30] sm:$0xff]
      %v179 = vld [vmem:[%s165 + $0x38] sm:$0xff]
      %v180 = vld [vmem:[%s165 + $0x40] sm:$0xff]
      %v181 = vld [vmem:[%s165 + $0x48] sm:$0xff]
      %v182 = vld [vmem:[%s165 + $0x50] sm:$0xff]
      %v183 = vld [vmem:[%s165 + $0x58] sm:$0xff]
      %v184 = vld [vmem:[%s165 + $0x60] sm:$0xff]
      %v185 = vld [vmem:[%s165 + $0x68] sm:$0xff]
      %v186 = vld [vmem:[%s165 + $0x70] sm:$0xff]
      %v187 = vld [vmem:[%s165 + $0x78] sm:$0xff]
      %v188 = vld [vmem:[%s1] sm:$0xf]
      %v189 = vld [vmem:[%s1 + $0x4] sm:$0xf]
      %v190 = vld [vmem:[%s1 + $0x8] sm:$0xf]
      %v191 = vld [vmem:[%s1 + $0xc] sm:$0xf]
      %v192 = vld [vmem:[%s1 + $0x10] sm:$0xf]
      %v193 = vld [vmem:[%s1 + $0x14] sm:$0xf]
      %v194 = vld [vmem:[%s1 + $0x18] sm:$0xf]
      %v195 = vld [vmem:[%s1 + $0x1c] sm:$0xf]
      %v196 = vld [vmem:[%s1 + $0x20] sm:$0xf]
      %v197 = vld [vmem:[%s1 + $0x24] sm:$0xf]
      %v198 = vld [vmem:[%s1 + $0x28] sm:$0xf]
      %v199 = vld [vmem:[%s1 + $0x2c] sm:$0xf]
      %v200 = vld [vmem:[%s1 + $0x30] sm:$0xf]
      %v201 = vld [vmem:[%s1 + $0x34] sm:$0xf]
      %v202 = vld [vmem:[%s1 + $0x38] sm:$0xf]
      %v203 = vld [vmem:[%s1 + $0x3c] sm:$0xf]
      %v204 = vld [vmem:[%s1 + $0x40] sm:$0xf]
      %v205 = vld [vmem:[%s1 + $0x44] sm:$0xf]
      %v206 = vld [vmem:[%s1 + $0x48] sm:$0xf]
      %v207 = vld [vmem:[%s1 + $0x4c] sm:$0xf]
      %v208 = vld [vmem:[%s1 + $0x50] sm:$0xf]
      %v209 = vld [vmem:[%s1 + $0x54] sm:$0xf]
      %v210 = vld [vmem:[%s1 + $0x58] sm:$0xf]
      %v211 = vld [vmem:[%s1 + $0x5c] sm:$0xf]
      %v212 = vld [vmem:[%s1 + $0x60] sm:$0xf]
      %v213 = vld [vmem:[%s1 + $0x64] sm:$0xf]
      %v214 = vld [vmem:[%s1 + $0x68] sm:$0xf]
      %v215 = vld [vmem:[%s1 + $0x6c] sm:$0xf]
      %v216 = vld [vmem:[%s1 + $0x70] sm:$0xf]
      %v217 = vld [vmem:[%s1 + $0x74] sm:$0xf]
      %v218 = vld [vmem:[%s1 + $0x78] sm:$0xf]
      %v219 = vld [vmem:[%s1 + $0x7c] sm:$0xf]
      %v236 = vunpack.c.l.b16 %v172
      %v237 = vunpack.c.h.b16 %v172
      %v238 = vunpack.c.l.b16 %v173
      %v239 = vunpack.c.h.b16 %v173
      %v240 = vunpack.c.l.b16 %v174
      %v241 = vunpack.c.h.b16 %v174
      %v242 = vunpack.c.l.b16 %v175
      %v243 = vunpack.c.h.b16 %v175
      %v244 = vunpack.c.l.b16 %v176
      %v245 = vunpack.c.h.b16 %v176
      %v246 = vunpack.c.l.b16 %v177
      %v247 = vunpack.c.h.b16 %v177
      %v248 = vunpack.c.l.b16 %v178
      %v249 = vunpack.c.h.b16 %v178
      %v250 = vunpack.c.l.b16 %v179
      %v251 = vunpack.c.h.b16 %v179
      %v252 = vunpack.c.l.b16 %v180
      %v253 = vunpack.c.h.b16 %v180
      %v254 = vunpack.c.l.b16 %v181
      %v255 = vunpack.c.h.b16 %v181
      %v256 = vunpack.c.l.b16 %v182
      %v257 = vunpack.c.h.b16 %v182
      %v258 = vunpack.c.l.b16 %v183
      %v259 = vunpack.c.h.b16 %v183
      %v260 = vunpack.c.l.b16 %v184
      %v261 = vunpack.c.h.b16 %v184
      %v262 = vunpack.c.l.b16 %v185
      %v263 = vunpack.c.h.b16 %v185
      %v264 = vunpack.c.l.b16 %v186
      %v265 = vunpack.c.h.b16 %v186
      %v266 = vunpack.c.l.b16 %v187
      %v267 = vunpack.c.h.b16 %v187
      %v268 = vpack.c.b16 %v238, %v236
      %v269 = vpack.c.b16 %v239, %v237
      %v270 = vpack.c.b16 %v242, %v240
      %v271 = vpack.c.b16 %v243, %v241
      %v272 = vpack.c.b16 %v246, %v244
      %v273 = vpack.c.b16 %v247, %v245
      %v274 = vpack.c.b16 %v250, %v248
      %v275 = vpack.c.b16 %v251, %v249
      %v276 = vpack.c.b16 %v254, %v252
      %v277 = vpack.c.b16 %v255, %v253
      %v278 = vpack.c.b16 %v258, %v256
      %v279 = vpack.c.b16 %v259, %v257
      %v280 = vpack.c.b16 %v262, %v260
      %v281 = vpack.c.b16 %v263, %v261
      %v282 = vpack.c.b16 %v266, %v264
      %v283 = vpack.c.b16 %v267, %v265
      %v332 = vunpack.c.l.b16 %v188
      %v333 = vunpack.c.l.b16 %v189
      %v334 = vunpack.c.l.b16 %v190
      %v335 = vunpack.c.l.b16 %v191
      %v336 = vunpack.c.l.b16 %v192
      %v337 = vunpack.c.l.b16 %v193
      %v338 = vunpack.c.l.b16 %v194
      %v339 = vunpack.c.l.b16 %v195
      %v340 = vunpack.c.l.b16 %v196
      %v341 = vunpack.c.l.b16 %v197
      %v342 = vunpack.c.l.b16 %v198
      %v343 = vunpack.c.l.b16 %v199
      %v344 = vunpack.c.l.b16 %v200
      %v345 = vunpack.c.l.b16 %v201
      %v346 = vunpack.c.l.b16 %v202
      %v347 = vunpack.c.l.b16 %v203
      %v348 = vunpack.c.l.b16 %v204
      %v349 = vunpack.c.l.b16 %v205
      %v350 = vunpack.c.l.b16 %v206
      %v351 = vunpack.c.l.b16 %v207
      %v352 = vunpack.c.l.b16 %v208
      %v353 = vunpack.c.l.b16 %v209
      %v354 = vunpack.c.l.b16 %v210
      %v355 = vunpack.c.l.b16 %v211
      %v356 = vunpack.c.l.b16 %v212
      %v357 = vunpack.c.l.b16 %v213
      %v358 = vunpack.c.l.b16 %v214
      %v359 = vunpack.c.l.b16 %v215
      %v360 = vunpack.c.l.b16 %v216
      %v361 = vunpack.c.l.b16 %v217
      %v362 = vunpack.c.l.b16 %v218
      %v363 = vunpack.c.l.b16 %v219
      %v364 = vpack.c.b16 %v333, %v332
      %v365 = vpack.c.b16 %v335, %v334
      %v366 = vpack.c.b16 %v337, %v336
      %v367 = vpack.c.b16 %v339, %v338
      %v368 = vpack.c.b16 %v341, %v340
      %v369 = vpack.c.b16 %v343, %v342
      %v370 = vpack.c.b16 %v345, %v344
      %v371 = vpack.c.b16 %v347, %v346
      %v372 = vpack.c.b16 %v349, %v348
      %v373 = vpack.c.b16 %v351, %v350
      %v374 = vpack.c.b16 %v353, %v352
      %v375 = vpack.c.b16 %v355, %v354
      %v376 = vpack.c.b16 %v357, %v356
      %v377 = vpack.c.b16 %v359, %v358
      %v378 = vpack.c.b16 %v361, %v360
      %v379 = vpack.c.b16 %v363, %v362
      %396 = vmatprep.subr.bf16.mxu0 0
      %397 = vmatpush1.bf16.msra.mxu0 %v371
      %398 = vmatprep.subr.bf16.mxu0 0
      %399 = vmatpush1.bf16.msra.mxu0 %v370
      %400 = vmatprep.subr.bf16.mxu0 0
      %401 = vmatpush1.bf16.msra.mxu0 %v369
      %402 = vmatprep.subr.bf16.mxu0 0
      %403 = vmatpush1.bf16.msra.mxu0 %v368
      %404 = vmatprep.subr.bf16.mxu0 0
      %405 = vmatpush1.bf16.msra.mxu0 %v367
      %406 = vmatprep.subr.bf16.mxu0 0
      %407 = vmatpush1.bf16.msra.mxu0 %v366
      %408 = vmatprep.subr.bf16.mxu0 0
      %409 = vmatpush1.bf16.msra.mxu0 %v365
      %410 = vmatprep.subr.bf16.mxu0 0
      %411 = vmatpush1.bf16.msra.mxu0 %v364
      %412 = vmatprep.subr.bf16.mxu0 0
      %413 = vmatpush2.bf16.msra.mxu0 %v379
      %414 = vmatprep.subr.bf16.mxu0 0
      %415 = vmatpush2.bf16.msra.mxu0 %v378
      %416 = vmatprep.subr.bf16.mxu0 0
      %417 = vmatpush2.bf16.msra.mxu0 %v377
      %418 = vmatprep.subr.bf16.mxu0 0
      %419 = vmatpush2.bf16.msra.mxu0 %v376
      %420 = vmatprep.subr.bf16.mxu0 0
      %421 = vmatpush2.bf16.msra.mxu0 %v375
      %422 = vmatprep.subr.bf16.mxu0 0
      %423 = vmatpush2.bf16.msra.mxu0 %v374
      %424 = vmatprep.subr.bf16.mxu0 0
      %425 = vmatpush2.bf16.msra.mxu0 %v373
      %426 = vmatprep.subr.bf16.mxu0 0
      %427 = vmatpush2.bf16.msra.mxu0 %v372
      %428 = vmatprep.mubr.bf16.mxu0 %v269
      %429 = vmatmul.mubr.bf16.gmra.mxu0 %v268
      %v430 = vpop.f32.mrf.mxu0
      %v431 = vadd.f32 0.0, %v430
      %v432 = vpop.f32.mrf.mxu0
      %v433 = vpop.f32.mrf.mxu0
      %v434 = vadd.f32 0.0, %v433
      %v435 = vpop.f32.mrf.mxu0
      %436 = vmatprep.mubr.bf16.mxu0 %v271
      %437 = vmatmul.mubr.bf16.gmra.mxu0 %v270
      %v438 = vpop.f32.mrf.mxu0
      %v439 = vadd.f32 0.0, %v438
      %v440 = vpop.f32.mrf.mxu0
      %v441 = vpop.f32.mrf.mxu0
      %v442 = vadd.f32 0.0, %v441
      %v443 = vpop.f32.mrf.mxu0
      %444 = vmatprep.mubr.bf16.mxu0 %v273
      %445 = vmatmul.mubr.bf16.gmra.mxu0 %v272
      %v446 = vpop.f32.mrf.mxu0
      %v447 = vadd.f32 0.0, %v446
      %v448 = vpop.f32.mrf.mxu0
      %v449 = vpop.f32.mrf.mxu0
      %v450 = vadd.f32 0.0, %v449
      %v451 = vpop.f32.mrf.mxu0
      %452 = vmatprep.mubr.bf16.mxu0 %v275
      %453 = vmatmul.mubr.bf16.gmra.mxu0 %v274
      %v454 = vpop.f32.mrf.mxu0
      %v455 = vadd.f32 0.0, %v454
      %v456 = vpop.f32.mrf.mxu0
      %v457 = vpop.f32.mrf.mxu0
      %v458 = vadd.f32 0.0, %v457
      %v459 = vpop.f32.mrf.mxu0
      %460 = vmatprep.mubr.bf16.mxu0 %v277
      %461 = vmatmul.mubr.bf16.gmra.mxu0 %v276
      %v462 = vpop.f32.mrf.mxu0
      %v463 = vadd.f32 0.0, %v462
      %v464 = vpop.f32.mrf.mxu0
      %v465 = vpop.f32.mrf.mxu0
      %v466 = vadd.f32 0.0, %v465
      %v467 = vpop.f32.mrf.mxu0
      %468 = vmatprep.mubr.bf16.mxu0 %v279
      %469 = vmatmul.mubr.bf16.gmra.mxu0 %v278
      %v470 = vpop.f32.mrf.mxu0
      %v471 = vadd.f32 0.0, %v470
      %v472 = vpop.f32.mrf.mxu0
      %v473 = vpop.f32.mrf.mxu0
      %v474 = vadd.f32 0.0, %v473
      %v475 = vpop.f32.mrf.mxu0
      %476 = vmatprep.mubr.bf16.mxu0 %v281
      %477 = vmatmul.mubr.bf16.gmra.mxu0 %v280
      %v478 = vpop.f32.mrf.mxu0
      %v479 = vadd.f32 0.0, %v478
      %v480 = vpop.f32.mrf.mxu0
      %v481 = vpop.f32.mrf.mxu0
      %v482 = vadd.f32 0.0, %v481
      %v483 = vpop.f32.mrf.mxu0
      %484 = vmatprep.mubr.bf16.mxu0 %v283
      %485 = vmatmul.mubr.bf16.gmra.mxu0 %v282
      %v486 = vpop.f32.mrf.mxu0
      %v487 = vadd.f32 0.0, %v486
      %v488 = vpop.f32.mrf.mxu0
      %v489 = vpop.f32.mrf.mxu0
      %v490 = vadd.f32 0.0, %v489
      %v491 = vpop.f32.mrf.mxu0
      %492 = vdwg.mxu0
      %v493 = vmax.f32 %v431, %v447
      %v494 = vmax.f32 %v434, %v450
      %v495 = vmax.f32 %v439, %v455
      %v496 = vmax.f32 %v442, %v458
      %v497 = vmax.f32 %v463, %v479
      %v498 = vmax.f32 %v466, %v482
      %v499 = vmax.f32 %v471, %v487
      %v500 = vmax.f32 %v474, %v490
      %v501 = vmax.f32 %v493, %v497
      %v502 = vmax.f32 %v494, %v498
      %v503 = vmax.f32 %v495, %v499
      %v504 = vmax.f32 %v496, %v500
      %v505 = vld [vmem:[%s2] sm:$0x1]
      %v507 = vlaneseq
      %v508 = vshrl.u32 %v507, 7
      %v509 = vsub.s32 0, %v508
      %v510 = vrot.slane %v505, %v509
      %v512 = vadd.f32 %v501, %v510
      %v513 = vadd.f32 %v502, %v510
      %v514 = vadd.f32 %v503, %v510
      %v515 = vadd.f32 %v504, %v510
      %v516 = vmax.f32 %v512, 0.0
      %v517 = vmax.f32 %v513, 0.0
      %v518 = vmax.f32 %v514, 0.0
      %v519 = vmax.f32 %v515, 0.0
      %v520 = vpack.c.bf16 %v517, %v516
      %v521 = vpack.c.bf16 %v519, %v518
      %v524 = vunpack.c.l.b16 %v520
      %v525 = vunpack.c.h.b16 %v520
      %v526 = vunpack.c.l.b16 %v521
      %v527 = vunpack.c.h.b16 %v521
      %v528 = vpack.c.b16 %v524, %v524
      %v529 = vpack.c.b16 %v525, %v525
      %v530 = vpack.c.b16 %v526, %v526
      %v531 = vpack.c.b16 %v527, %v527
      %536 = vst [vmem:[%s170] sm:$0xf] %v528
      %537 = vst [vmem:[%s170 + $0x4] sm:$0xf] %v529
      %538 = vst [vmem:[%s170 + $0x8] sm:$0xf] %v530
      %539 = vst [vmem:[%s170 + $0xc] sm:$0xf] %v531
      %p540 = scmp.lt.s32.totalorder %s14, 1
      %s541 = scalar_select %p540, %s14, 1
      %s542 = smul.addr %s541, 4
      %s543 = smul.addr %s542, 4
      %s544 = scalar_lea.vmem %s3, %s543
      // Predicated region
      $region33: #{cnn_forward.4} parent=31 // pred_check
        %p545 = pneg %p100
      $region34: #{cnn_forward.4} parent=31 // pred_check_branch
        %547 = sbr.rel (%p545) target = $region36
      $region35: #{cnn_forward.4} parent=31 // pred_region
        _
      $region36: #{cnn_forward.4} parent=31 // pred_fallthru
        _
    $region32: #{cnn_forward.4} parent=5 // pred_fallthru
      _
    %p548 = scmp.le.s32.totalorder 2, %s9
    // Predicated region
    $region37: #{cnn_forward.4} parent=5 // pred_check
      %p549 = pneg %p548
    $region38: #{cnn_forward.4} parent=5 // pred_check_branch
      %551 = sbr.rel (%p549) target = $region40
    $region39: #{cnn_forward.4} parent=5 // pred_region
      %s552 = ssub.s32 %s9, 2
      // Predicated region
      $region41: #{cnn_forward.4} parent=39 // pred_check
        %p553 = pneg %p106
      $region42: #{cnn_forward.4} parent=39 // pred_check_branch
        %555 = sbr.rel (%p553) target = $region44
      $region43: #{cnn_forward.4} parent=39 // pred_region
        %p556 = scmp.lt.s32.totalorder %s15, 1
        %s557 = scalar_select %p556, %s15, 1
        %s558 = smul.addr %s557, 4
        %s559 = smul.addr %s558, 4
        %s560 = scalar_lea.vmem %s3, %s559
      $region44: #{cnn_forward.4} parent=39 // pred_fallthru
        _
    $region40: #{cnn_forward.4} parent=5 // pred_fallthru
      _
  $region6: #{cnn_forward.4} parent=0 // loop_footer
    %s13 = sadd.s32 1, %s9
  $region7: #{cnn_forward.4} parent=0 // loop_footer_branch
    %8 = sbr.rel target = $region3
  $region8: #{cnn_forward.4} parent=0 // loop_exit
    _

// kernel: cnn_forward.5
$region0: #{cnn_forward.5}
  #allocation0 [shape = 'u32[]', space=smem, size = 0x4, offset = 0x4, fixed_abs, tag = 'smem constant byte address 0x4 - core index']
  #allocation1 [shape = 'u32[144,128]{1,0:T(1,128)}', space=vmem, size = 0x12000, scoped, tag = 'internal scratch']
  %s0 = inlined_call_operand.vmem [shape: bf16[2,512], index: 0, kind: input, shape index: {}]
  %s1 = inlined_call_operand.vmem [shape: bf16[512,128], index: 1, kind: input, shape index: {}]
  %s2 = inlined_call_operand.vmem [shape: f32[1,128], index: 2, kind: input, shape index: {}]
  %s3 = inlined_call_operand.vmem [shape: bf16[128,128], index: 3, kind: input, shape index: {}]
  %s4 = inlined_call_operand.vmem [shape: f32[1,128], index: 4, kind: input, shape index: {}]
  %s5 = inlined_call_operand.vmem [shape: bf16[128,128], index: 5, kind: input, shape index: {}]
  %s6 = inlined_call_operand.vmem [shape: f32[1,128], index: 6, kind: input, shape index: {}]
  %s7 = inlined_call_operand.hbm [shape: f32[2,128], index: 7, kind: output, shape index: {}]
  %s8 = sld [smem:[#allocation0]]
  $region38: #{cnn_forward.5} parent=0
    _
  %s10 = ssub.s32 1, %s8
  %s11 = scalar_select 0, %s10, %s8
  $region1: #{cnn_forward.5} parent=0
    #allocation2 [shape = 'u8[1024]{0}', space=vmem, size = 0x400, scoped, tag = 'output window, operand 0, single buffered']
    #allocation3 [shape = 's32[1]{0}', space=sflag, size = 0x4, scoped, tag = 'scoped memory for cnn_forward.5']
    %12 = vsyncpa [#allocation3], 0
    // Predicated region
    $region2: #{cnn_forward.5} parent=1 // pred_check
      _
    $region3: #{cnn_forward.5} parent=1 // pred_check_branch
      %14 = sbr.rel (0) target = $region5
    $region4: #{cnn_forward.5} parent=1 // pred_region
      _
    $region5: #{cnn_forward.5} parent=1 // pred_fallthru
      _
    // Predicated region
    $region6: #{cnn_forward.5} parent=1 // pred_check
      _
    $region7: #{cnn_forward.5} parent=1 // pred_check_branch
      %16 = sbr.rel (0) target = $region9
    $region8: #{cnn_forward.5} parent=1 // pred_region
      _
    $region9: #{cnn_forward.5} parent=1 // pred_fallthru
      _
    // Predicated region
    $region10: #{cnn_forward.5} parent=1 // pred_check
      _
    $region11: #{cnn_forward.5} parent=1 // pred_check_branch
      %18 = sbr.rel (0) target = $region13
    $region12: #{cnn_forward.5} parent=1 // pred_region
      _
    $region13: #{cnn_forward.5} parent=1 // pred_fallthru
      _
    // Predicated region
    $region14: #{cnn_forward.5} parent=1 // pred_check
      _
    $region15: #{cnn_forward.5} parent=1 // pred_check_branch
      %20 = sbr.rel (0) target = $region17
    $region16: #{cnn_forward.5} parent=1 // pred_region
      _
    $region17: #{cnn_forward.5} parent=1 // pred_fallthru
      _
    // Predicated region
    $region18: #{cnn_forward.5} parent=1 // pred_check
      _
    $region19: #{cnn_forward.5} parent=1 // pred_check_branch
      %22 = sbr.rel (0) target = $region21
    $region20: #{cnn_forward.5} parent=1 // pred_region
      _
    $region21: #{cnn_forward.5} parent=1 // pred_fallthru
      _
    // Predicated region
    $region22: #{cnn_forward.5} parent=1 // pred_check
      _
    $region23: #{cnn_forward.5} parent=1 // pred_check_branch
      %24 = sbr.rel (0) target = $region25
    $region24: #{cnn_forward.5} parent=1 // pred_region
      _
    $region25: #{cnn_forward.5} parent=1 // pred_fallthru
      _
    // Predicated region
    $region26: #{cnn_forward.5} parent=1 // pred_check
      _
    $region27: #{cnn_forward.5} parent=1 // pred_check_branch
      %26 = sbr.rel (0) target = $region29
    $region28: #{cnn_forward.5} parent=1 // pred_region
      _
    $region29: #{cnn_forward.5} parent=1 // pred_fallthru
      _
    %v28 = vld [vmem:[%s0] sm:$0xf]
    %v29 = vld [vmem:[%s1] sm:$0xf]
    %v30 = vld [vmem:[%s1 + $0x4] sm:$0xf]
    %v31 = vld [vmem:[%s1 + $0x8] sm:$0xf]
    %v32 = vld [vmem:[%s1 + $0xc] sm:$0xf]
    %v33 = vld [vmem:[%s1 + $0x10] sm:$0xf]
    %v34 = vld [vmem:[%s1 + $0x14] sm:$0xf]
    %v35 = vld [vmem:[%s1 + $0x18] sm:$0xf]
    %v36 = vld [vmem:[%s1 + $0x1c] sm:$0xf]
    %v37 = vld [vmem:[%s1 + $0x20] sm:$0xf]
    %v38 = vld [vmem:[%s1 + $0x24] sm:$0xf]
    %v39 = vld [vmem:[%s1 + $0x28] sm:$0xf]
    %v40 = vld [vmem:[%s1 + $0x2c] sm:$0xf]
    %v41 = vld [vmem:[%s1 + $0x30] sm:$0xf]
    %v42 = vld [vmem:[%s1 + $0x34] sm:$0xf]
    %v43 = vld [vmem:[%s1 + $0x38] sm:$0xf]
    %v44 = vld [vmem:[%s1 + $0x3c] sm:$0xf]
    %v45 = vld [vmem:[%s1 + $0x40] sm:$0xf]
    %v46 = vld [vmem:[%s1 + $0x44] sm:$0xf]
    %v47 = vld [vmem:[%s1 + $0x48] sm:$0xf]
    %v48 = vld [vmem:[%s1 + $0x4c] sm:$0xf]
    %v49 = vld [vmem:[%s1 + $0x50] sm:$0xf]
    %v50 = vld [vmem:[%s1 + $0x54] sm:$0xf]
    %v51 = vld [vmem:[%s1 + $0x58] sm:$0xf]
    %v52 = vld [vmem:[%s1 + $0x5c] sm:$0xf]
    %v53 = vld [vmem:[%s1 + $0x60] sm:$0xf]
    %v54 = vld [vmem:[%s1 + $0x64] sm:$0xf]
    %v55 = vld [vmem:[%s1 + $0x68] sm:$0xf]
    %v56 = vld [vmem:[%s1 + $0x6c] sm:$0xf]
    %v57 = vld [vmem:[%s1 + $0x70] sm:$0xf]
    %v58 = vld [vmem:[%s1 + $0x74] sm:$0xf]
    %v59 = vld [vmem:[%s1 + $0x78] sm:$0xf]
    %v60 = vld [vmem:[%s1 + $0x7c] sm:$0xf]
    %v61 = vld [vmem:[%s1 + $0x80] sm:$0xf]
    %v62 = vld [vmem:[%s1 + $0x84] sm:$0xf]
    %v63 = vld [vmem:[%s1 + $0x88] sm:$0xf]
    %v64 = vld [vmem:[%s1 + $0x8c] sm:$0xf]
    %v65 = vld [vmem:[%s1 + $0x90] sm:$0xf]
    %v66 = vld [vmem:[%s1 + $0x94] sm:$0xf]
    %v67 = vld [vmem:[%s1 + $0x98] sm:$0xf]
    %v68 = vld [vmem:[%s1 + $0x9c] sm:$0xf]
    %v69 = vld [vmem:[%s1 + $0xa0] sm:$0xf]
    %v70 = vld [vmem:[%s1 + $0xa4] sm:$0xf]
    %v71 = vld [vmem:[%s1 + $0xa8] sm:$0xf]
    %v72 = vld [vmem:[%s1 + $0xac] sm:$0xf]
    %v73 = vld [vmem:[%s1 + $0xb0] sm:$0xf]
    %v74 = vld [vmem:[%s1 + $0xb4] sm:$0xf]
    %v75 = vld [vmem:[%s1 + $0xb8] sm:$0xf]
    %v76 = vld [vmem:[%s1 + $0xbc] sm:$0xf]
    %v77 = vld [vmem:[%s1 + $0xc0] sm:$0xf]
    %v78 = vld [vmem:[%s1 + $0xc4] sm:$0xf]
    %v79 = vld [vmem:[%s1 + $0xc8] sm:$0xf]
    %v80 = vld [vmem:[%s1 + $0xcc] sm:$0xf]
    %v81 = vld [vmem:[%s1 + $0xd0] sm:$0xf]
    %v82 = vld [vmem:[%s1 + $0xd4] sm:$0xf]
    %v83 = vld [vmem:[%s1 + $0xd8] sm:$0xf]
    %v84 = vld [vmem:[%s1 + $0xdc] sm:$0xf]
    %v85 = vld [vmem:[%s1 + $0xe0] sm:$0xf]
    %v86 = vld [vmem:[%s1 + $0xe4] sm:$0xf]
    %v87 = vld [vmem:[%s1 + $0xe8] sm:$0xf]
    %v88 = vld [vmem:[%s1 + $0xec] sm:$0xf]
    %v89 = vld [vmem:[%s1 + $0xf0] sm:$0xf]
    %v90 = vld [vmem:[%s1 + $0xf4] sm:$0xf]
    %v91 = vld [vmem:[%s1 + $0xf8] sm:$0xf]
    %v92 = vld [vmem:[%s1 + $0xfc] sm:$0xf]
    %v93 = vld [vmem:[%s2] sm:$0x1]
    %v95 = vlaneseq
    %v96 = vshrl.u32 %v95, 7
    %v97 = vsub.s32 0, %v96
    %v98 = vrot.slane %v93, %v97
    %v102 = vunpack.c.l.s4 1966171168
    %v103 = vunpack.c.0.s8 %v102
    %v104 = vlaneseq
    %v105 = vshrl.u32 %v104, 7
    %v106 = vsub.s32 %v103, %v105
    %v107 = vrot.slane %v28, %v106
    %v108 = vcombine.high %v107, %v107
    %v110 = vunpack.c.l.s4 1966171168
    %v111 = vunpack.c.0.s8 %v110
    %v112 = vlaneseq
    %v113 = vshrl.u32 %v112, 7
    %v114 = vsub.s32 %v111, %v113
    %v115 = vrot.slane %v107, %v114
    %v117 = vunpack.c.l.s4 1966171168
    %v118 = vunpack.c.0.s8 %v117
    %v119 = vlaneseq
    %v120 = vshrl.u32 %v119, 7
    %v121 = vsub.s32 %v118, %v120
    %v122 = vrot.slane %v108, %v121
    %v123 = vcombine.high %v115, %v115
    %v124 = vcombine.high %v122, %v122
    %v193 = vunpack.c.l.b16 %v29
    %v194 = vunpack.c.l.b16 %v30
    %v195 = vunpack.c.l.b16 %v31
    %v196 = vunpack.c.l.b16 %v32
    %v197 = vunpack.c.l.b16 %v33
    %v198 = vunpack.c.l.b16 %v34
    %v199 = vunpack.c.l.b16 %v35
    %v200 = vunpack.c.l.b16 %v36
    %v201 = vunpack.c.l.b16 %v37
    %v202 = vunpack.c.l.b16 %v38
    %v203 = vunpack.c.l.b16 %v39
    %v204 = vunpack.c.l.b16 %v40
    %v205 = vunpack.c.l.b16 %v41
    %v206 = vunpack.c.l.b16 %v42
    %v207 = vunpack.c.l.b16 %v43
    %v208 = vunpack.c.l.b16 %v44
    %v209 = vunpack.c.l.b16 %v45
    %v210 = vunpack.c.l.b16 %v46
    %v211 = vunpack.c.l.b16 %v47
    %v212 = vunpack.c.l.b16 %v48
    %v213 = vunpack.c.l.b16 %v49
    %v214 = vunpack.c.l.b16 %v50
    %v215 = vunpack.c.l.b16 %v51
    %v216 = vunpack.c.l.b16 %v52
    %v217 = vunpack.c.l.b16 %v53
    %v218 = vunpack.c.l.b16 %v54
    %v219 = vunpack.c.l.b16 %v55
    %v220 = vunpack.c.l.b16 %v56
    %v221 = vunpack.c.l.b16 %v57
    %v222 = vunpack.c.l.b16 %v58
    %v223 = vunpack.c.l.b16 %v59
    %v224 = vunpack.c.l.b16 %v60
    %v225 = vunpack.c.l.b16 %v61
    %v226 = vunpack.c.l.b16 %v62
    %v227 = vunpack.c.l.b16 %v63
    %v228 = vunpack.c.l.b16 %v64
    %v229 = vunpack.c.l.b16 %v65
    %v230 = vunpack.c.l.b16 %v66
    %v231 = vunpack.c.l.b16 %v67
    %v232 = vunpack.c.l.b16 %v68
    %v233 = vunpack.c.l.b16 %v69
    %v234 = vunpack.c.l.b16 %v70
    %v235 = vunpack.c.l.b16 %v71
    %v236 = vunpack.c.l.b16 %v72
    %v237 = vunpack.c.l.b16 %v73
    %v238 = vunpack.c.l.b16 %v74
    %v239 = vunpack.c.l.b16 %v75
    %v240 = vunpack.c.l.b16 %v76
    %v241 = vunpack.c.l.b16 %v77
    %v242 = vunpack.c.l.b16 %v78
    %v243 = vunpack.c.l.b16 %v79
    %v244 = vunpack.c.l.b16 %v80
    %v245 = vunpack.c.l.b16 %v81
    %v246 = vunpack.c.l.b16 %v82
    %v247 = vunpack.c.l.b16 %v83
    %v248 = vunpack.c.l.b16 %v84
    %v249 = vunpack.c.l.b16 %v85
    %v250 = vunpack.c.l.b16 %v86
    %v251 = vunpack.c.l.b16 %v87
    %v252 = vunpack.c.l.b16 %v88
    %v253 = vunpack.c.l.b16 %v89
    %v254 = vunpack.c.l.b16 %v90
    %v255 = vunpack.c.l.b16 %v91
    %v256 = vunpack.c.l.b16 %v92
    %v257 = vpack.c.b16 %v194, %v193
    %v258 = vpack.c.b16 %v196, %v195
    %v259 = vpack.c.b16 %v198, %v197
    %v260 = vpack.c.b16 %v200, %v199
    %v261 = vpack.c.b16 %v202, %v201
    %v262 = vpack.c.b16 %v204, %v203
    %v263 = vpack.c.b16 %v206, %v205
    %v264 = vpack.c.b16 %v208, %v207
    %v265 = vpack.c.b16 %v210, %v209
    %v266 = vpack.c.b16 %v212, %v211
    %v267 = vpack.c.b16 %v214, %v213
    %v268 = vpack.c.b16 %v216, %v215
    %v269 = vpack.c.b16 %v218, %v217
    %v270 = vpack.c.b16 %v220, %v219
    %v271 = vpack.c.b16 %v222, %v221
    %v272 = vpack.c.b16 %v224, %v223
    %v273 = vpack.c.b16 %v226, %v225
    %v274 = vpack.c.b16 %v228, %v227
    %v275 = vpack.c.b16 %v230, %v229
    %v276 = vpack.c.b16 %v232, %v231
    %v277 = vpack.c.b16 %v234, %v233
    %v278 = vpack.c.b16 %v236, %v235
    %v279 = vpack.c.b16 %v238, %v237
    %v280 = vpack.c.b16 %v240, %v239
    %v281 = vpack.c.b16 %v242, %v241
    %v282 = vpack.c.b16 %v244, %v243
    %v283 = vpack.c.b16 %v246, %v245
    %v284 = vpack.c.b16 %v248, %v247
    %v285 = vpack.c.b16 %v250, %v249
    %v286 = vpack.c.b16 %v252, %v251
    %v287 = vpack.c.b16 %v254, %v253
    %v288 = vpack.c.b16 %v256, %v255
    %321 = vmatprep.subr.bf16.mxu0 0
    %322 = vmatpush1.bf16.msra.mxu0 %v264
    %323 = vmatprep.subr.bf16.mxu0 0
    %324 = vmatpush1.bf16.msra.mxu0 %v263
    %325 = vmatprep.subr.bf16.mxu0 0
    %326 = vmatpush1.bf16.msra.mxu0 %v262
    %327 = vmatprep.subr.bf16.mxu0 0
    %328 = vmatpush1.bf16.msra.mxu0 %v261
    %329 = vmatprep.subr.bf16.mxu0 0
    %330 = vmatpush1.bf16.msra.mxu0 %v260
    %331 = vmatprep.subr.bf16.mxu0 0
    %332 = vmatpush1.bf16.msra.mxu0 %v259
    %333 = vmatprep.subr.bf16.mxu0 0
    %334 = vmatpush1.bf16.msra.mxu0 %v258
    %335 = vmatprep.subr.bf16.mxu0 0
    %336 = vmatpush1.bf16.msra.mxu0 %v257
    %337 = vmatprep.subr.bf16.mxu0 0
    %338 = vmatpush2.bf16.msra.mxu0 %v272
    %339 = vmatprep.subr.bf16.mxu0 0
    %340 = vmatpush2.bf16.msra.mxu0 %v271
    %341 = vmatprep.subr.bf16.mxu0 0
    %342 = vmatpush2.bf16.msra.mxu0 %v270
    %343 = vmatprep.subr.bf16.mxu0 0
    %344 = vmatpush2.bf16.msra.mxu0 %v269
    %345 = vmatprep.subr.bf16.mxu0 0
    %346 = vmatpush2.bf16.msra.mxu0 %v268
    %347 = vmatprep.subr.bf16.mxu0 0
    %348 = vmatpush2.bf16.msra.mxu0 %v267
    %349 = vmatprep.subr.bf16.mxu0 0
    %350 = vmatpush2.bf16.msra.mxu0 %v266
    %351 = vmatprep.subr.bf16.mxu0 0
    %352 = vmatpush2.bf16.msra.mxu0 %v265
    %353 = vmatprep.mubr.bf16.mxu0 %v122
    %354 = vmatmul.mubr.bf16.gmra.mxu0 %v115
    %v355 = vpop.f32.mrf.mxu0
    %v356 = vadd.f32 %v98, %v355
    %v357 = vpop.f32.mrf.mxu0
    %v358 = vpop.f32.mrf.mxu0
    %v359 = vpop.f32.mrf.mxu0
    %360 = vdwg.mxu0
    %361 = vmatprep.subr.bf16.mxu0 0
    %362 = vmatpush1.bf16.msra.mxu0 %v280
    %363 = vmatprep.subr.bf16.mxu0 0
    %364 = vmatpush1.bf16.msra.mxu0 %v279
    %365 = vmatprep.subr.bf16.mxu0 0
    %366 = vmatpush1.bf16.msra.mxu0 %v278
    %367 = vmatprep.subr.bf16.mxu0 0
    %368 = vmatpush1.bf16.msra.mxu0 %v277
    %369 = vmatprep.subr.bf16.mxu0 0
    %370 = vmatpush1.bf16.msra.mxu0 %v276
    %371 = vmatprep.subr.bf16.mxu0 0
    %372 = vmatpush1.bf16.msra.mxu0 %v275
    %373 = vmatprep.subr.bf16.mxu0 0
    %374 = vmatpush1.bf16.msra.mxu0 %v274
    %375 = vmatprep.subr.bf16.mxu0 0
    %376 = vmatpush1.bf16.msra.mxu0 %v273
    %377 = vmatprep.subr.bf16.mxu0 0
    %378 = vmatpush2.bf16.msra.mxu0 %v288
    %379 = vmatprep.subr.bf16.mxu0 0
    %380 = vmatpush2.bf16.msra.mxu0 %v287
    %381 = vmatprep.subr.bf16.mxu0 0
    %382 = vmatpush2.bf16.msra.mxu0 %v286
    %383 = vmatprep.subr.bf16.mxu0 0
    %384 = vmatpush2.bf16.msra.mxu0 %v285
    %385 = vmatprep.subr.bf16.mxu0 0
    %386 = vmatpush2.bf16.msra.mxu0 %v284
    %387 = vmatprep.subr.bf16.mxu0 0
    %388 = vmatpush2.bf16.msra.mxu0 %v283
    %389 = vmatprep.subr.bf16.mxu0 0
    %390 = vmatpush2.bf16.msra.mxu0 %v282
    %391 = vmatprep.subr.bf16.mxu0 0
    %392 = vmatpush2.bf16.msra.mxu0 %v281
    %393 = vmatprep.mubr.bf16.mxu0 %v124
    %394 = vmatmul.mubr.bf16.gmra.mxu0 %v123
    %v395 = vpop.f32.mrf.mxu0
    %v396 = vadd.f32 %v356, %v395
    %v397 = vpop.f32.mrf.mxu0
    %v398 = vpop.f32.mrf.mxu0
    %v399 = vpop.f32.mrf.mxu0
    %400 = vdwg.mxu0
    %v401 = vmax.f32 %v396, 0.0
    %v402 = vpack.c.bf16 %v401, %v401
    %v403 = vld [vmem:[%s3] sm:$0xf]
    %v404 = vld [vmem:[%s3 + $0x4] sm:$0xf]
    %v405 = vld [vmem:[%s3 + $0x8] sm:$0xf]
    %v406 = vld [vmem:[%s3 + $0xc] sm:$0xf]
    %v407 = vld [vmem:[%s3 + $0x10] sm:$0xf]
    %v408 = vld [vmem:[%s3 + $0x14] sm:$0xf]
    %v409 = vld [vmem:[%s3 + $0x18] sm:$0xf]
    %v410 = vld [vmem:[%s3 + $0x1c] sm:$0xf]
    %v411 = vld [vmem:[%s3 + $0x20] sm:$0xf]
    %v412 = vld [vmem:[%s3 + $0x24] sm:$0xf]
    %v413 = vld [vmem:[%s3 + $0x28] sm:$0xf]
    %v414 = vld [vmem:[%s3 + $0x2c] sm:$0xf]
    %v415 = vld [vmem:[%s3 + $0x30] sm:$0xf]
    %v416 = vld [vmem:[%s3 + $0x34] sm:$0xf]
    %v417 = vld [vmem:[%s3 + $0x38] sm:$0xf]
    %v418 = vld [vmem:[%s3 + $0x3c] sm:$0xf]
    %v419 = vld [vmem:[%s4] sm:$0x1]
    %v421 = vlaneseq
    %v422 = vshrl.u32 %v421, 7
    %v423 = vsub.s32 0, %v422
    %v424 = vrot.slane %v419, %v423
    %v442 = vunpack.c.l.b16 %v403
    %v443 = vunpack.c.l.b16 %v404
    %v444 = vunpack.c.l.b16 %v405
    %v445 = vunpack.c.l.b16 %v406
    %v446 = vunpack.c.l.b16 %v407
    %v447 = vunpack.c.l.b16 %v408
    %v448 = vunpack.c.l.b16 %v409
    %v449 = vunpack.c.l.b16 %v410
    %v450 = vunpack.c.l.b16 %v411
    %v451 = vunpack.c.l.b16 %v412
    %v452 = vunpack.c.l.b16 %v413
    %v453 = vunpack.c.l.b16 %v414
    %v454 = vunpack.c.l.b16 %v415
    %v455 = vunpack.c.l.b16 %v416
    %v456 = vunpack.c.l.b16 %v417
    %v457 = vunpack.c.l.b16 %v418
    %v458 = vpack.c.b16 %v443, %v442
    %v459 = vpack.c.b16 %v445, %v444
    %v460 = vpack.c.b16 %v447, %v446
    %v461 = vpack.c.b16 %v449, %v448
    %v462 = vpack.c.b16 %v451, %v450
    %v463 = vpack.c.b16 %v453, %v452
    %v464 = vpack.c.b16 %v455, %v454
    %v465 = vpack.c.b16 %v457, %v456
    %474 = vmatprep.subr.bf16.mxu0 0
    %475 = vmatpush1.bf16.msra.mxu0 %v465
    %476 = vmatprep.subr.bf16.mxu0 0
    %477 = vmatpush1.bf16.msra.mxu0 %v464
    %478 = vmatprep.subr.bf16.mxu0 0
    %479 = vmatpush1.bf16.msra.mxu0 %v463
    %480 = vmatprep.subr.bf16.mxu0 0
    %481 = vmatpush1.bf16.msra.mxu0 %v462
    %482 = vmatprep.subr.bf16.mxu0 0
    %483 = vmatpush1.bf16.msra.mxu0 %v461
    %484 = vmatprep.subr.bf16.mxu0 0
    %485 = vmatpush1.bf16.msra.mxu0 %v460
    %486 = vmatprep.subr.bf16.mxu0 0
    %487 = vmatpush1.bf16.msra.mxu0 %v459
    %488 = vmatprep.subr.bf16.mxu0 0
    %489 = vmatpush1.bf16.msra.mxu0 %v458
    %490 = vmatprep.subr.bf16.mxu0 0
    %491 = vmatpush2.bf16.msra.mxu0 0
    %492 = vmatprep.subr.bf16.mxu0 0
    %493 = vmatpush2.bf16.msra.mxu0 0
    %494 = vmatprep.subr.bf16.mxu0 0
    %495 = vmatpush2.bf16.msra.mxu0 0
    %496 = vmatprep.subr.bf16.mxu0 0
    %497 = vmatpush2.bf16.msra.mxu0 0
    %498 = vmatprep.subr.bf16.mxu0 0
    %499 = vmatpush2.bf16.msra.mxu0 0
    %500 = vmatprep.subr.bf16.mxu0 0
    %501 = vmatpush2.bf16.msra.mxu0 0
    %502 = vmatprep.subr.bf16.mxu0 0
    %503 = vmatpush2.bf16.msra.mxu0 0
    %504 = vmatprep.subr.bf16.mxu0 0
    %505 = vmatpush2.bf16.msra.mxu0 0
    %506 = vmatprep.mubr.bf16.mxu0 0
    %507 = vmatmul.mubr.bf16.gmra.mxu0 %v402
    %v508 = vpop.f32.mrf.mxu0
    %v509 = vadd.f32 %v424, %v508
    %v510 = vpop.f32.mrf.mxu0
    %v511 = vpop.f32.mrf.mxu0
    %v512 = vpop.f32.mrf.mxu0
    %513 = vdwg.mxu0
    %v514 = vmax.f32 %v509, 0.0
    %v515 = vpack.c.bf16 %v514, %v514
    %v516 = vld [vmem:[%s5] sm:$0xf]
    %v517 = vld [vmem:[%s5 + $0x4] sm:$0xf]
    %v518 = vld [vmem:[%s5 + $0x8] sm:$0xf]
    %v519 = vld [vmem:[%s5 + $0xc] sm:$0xf]
    %v520 = vld [vmem:[%s5 + $0x10] sm:$0xf]
    %v521 = vld [vmem:[%s5 + $0x14] sm:$0xf]
    %v522 = vld [vmem:[%s5 + $0x18] sm:$0xf]
    %v523 = vld [vmem:[%s5 + $0x1c] sm:$0xf]
    %v524 = vld [vmem:[%s5 + $0x20] sm:$0xf]
    %v525 = vld [vmem:[%s5 + $0x24] sm:$0xf]
    %v526 = vld [vmem:[%s5 + $0x28] sm:$0xf]
    %v527 = vld [vmem:[%s5 + $0x2c] sm:$0xf]
    %v528 = vld [vmem:[%s5 + $0x30] sm:$0xf]
    %v529 = vld [vmem:[%s5 + $0x34] sm:$0xf]
    %v530 = vld [vmem:[%s5 + $0x38] sm:$0xf]
    %v531 = vld [vmem:[%s5 + $0x3c] sm:$0xf]
    %v532 = vld [vmem:[%s6] sm:$0x1]
    %v534 = vlaneseq
    %v535 = vshrl.u32 %v534, 7
    %v536 = vsub.s32 0, %v535
    %v537 = vrot.slane %v532, %v536
    %v555 = vunpack.c.l.b16 %v516
    %v556 = vunpack.c.l.b16 %v517
    %v557 = vunpack.c.l.b16 %v518
    %v558 = vunpack.c.l.b16 %v519
    %v559 = vunpack.c.l.b16 %v520
    %v560 = vunpack.c.l.b16 %v521
    %v561 = vunpack.c.l.b16 %v522
    %v562 = vunpack.c.l.b16 %v523
    %v563 = vunpack.c.l.b16 %v524
    %v564 = vunpack.c.l.b16 %v525
    %v565 = vunpack.c.l.b16 %v526
    %v566 = vunpack.c.l.b16 %v527
    %v567 = vunpack.c.l.b16 %v528
    %v568 = vunpack.c.l.b16 %v529
    %v569 = vunpack.c.l.b16 %v530
    %v570 = vunpack.c.l.b16 %v531
    %v571 = vpack.c.b16 %v556, %v555
    %v572 = vpack.c.b16 %v558, %v557
    %v573 = vpack.c.b16 %v560, %v559
    %v574 = vpack.c.b16 %v562, %v561
    %v575 = vpack.c.b16 %v564, %v563
    %v576 = vpack.c.b16 %v566, %v565
    %v577 = vpack.c.b16 %v568, %v567
    %v578 = vpack.c.b16 %v570, %v569
    %587 = vmatprep.subr.bf16.mxu0 0
    %588 = vmatpush1.bf16.msra.mxu0 %v578
    %589 = vmatprep.subr.bf16.mxu0 0
    %590 = vmatpush1.bf16.msra.mxu0 %v577
    %591 = vmatprep.subr.bf16.mxu0 0
    %592 = vmatpush1.bf16.msra.mxu0 %v576
    %593 = vmatprep.subr.bf16.mxu0 0
    %594 = vmatpush1.bf16.msra.mxu0 %v575
    %595 = vmatprep.subr.bf16.mxu0 0
    %596 = vmatpush1.bf16.msra.mxu0 %v574
    %597 = vmatprep.subr.bf16.mxu0 0
    %598 = vmatpush1.bf16.msra.mxu0 %v573
    %599 = vmatprep.subr.bf16.mxu0 0
    %600 = vmatpush1.bf16.msra.mxu0 %v572
    %601 = vmatprep.subr.bf16.mxu0 0
    %602 = vmatpush1.bf16.msra.mxu0 %v571
    %603 = vmatprep.subr.bf16.mxu0 0
    %604 = vmatpush2.bf16.msra.mxu0 0
    %605 = vmatprep.subr.bf16.mxu0 0
    %606 = vmatpush2.bf16.msra.mxu0 0
    %607 = vmatprep.subr.bf16.mxu0 0
    %608 = vmatpush2.bf16.msra.mxu0 0
    %609 = vmatprep.subr.bf16.mxu0 0
    %610 = vmatpush2.bf16.msra.mxu0 0
    %611 = vmatprep.subr.bf16.mxu0 0
    %612 = vmatpush2.bf16.msra.mxu0 0
    %613 = vmatprep.subr.bf16.mxu0 0
    %614 = vmatpush2.bf16.msra.mxu0 0
    %615 = vmatprep.subr.bf16.mxu0 0
    %616 = vmatpush2.bf16.msra.mxu0 0
    %617 = vmatprep.subr.bf16.mxu0 0
    %618 = vmatpush2.bf16.msra.mxu0 0
    %619 = vmatprep.mubr.bf16.mxu0 0
    %620 = vmatmul.mubr.bf16.gmra.mxu0 %v515
    %v621 = vpop.f32.mrf.mxu0
    %v622 = vadd.f32 %v537, %v621
    %v623 = vpop.f32.mrf.mxu0
    %v624 = vpop.f32.mrf.mxu0
    %v625 = vpop.f32.mrf.mxu0
    %626 = vdwg.mxu0
    %vm627 = vcmask 1041408
    %v628 = vsel %vm627, %v622, -inf
    %629 = vmax.xlane.f32.xlu0 %v628
    %v630 = vpop.xlane.xlu0 %629
    %v631 = vsub.f32 %v622, %v630
    %v632 = vmul.f32 %v631, 1.442695
    %v633 = vpow.pop %v632
    %v634 = vsel %vm627, %v633, 0.0
    %635 = vadd.xlane.f32.xlu0 %v634
    %v636 = vpop.xlane.xlu0 %635
    %v637 = vlog2.pop %v636
    %v638 = vmul.f32 %v637, 0.6931472
    %v639 = vsub.f32 %v631, %v638
    %640 = vst [vmem:[#allocation2] sm:$0x3] %v639
    // Predicated region
    $region30: #{cnn_forward.5} parent=1 // pred_check
      _
    $region31: #{cnn_forward.5} parent=1 // pred_check_branch
      %642 = sbr.rel (0) target = $region33
    $region32: #{cnn_forward.5} parent=1 // pred_region
      %s644 = ssub.s32 32, 32
      %645 = vsyncadd [#allocation3], %s644
      %s647 = sshll.u32 [#allocation2], 4
      %s648 = int_to_ptr.vmem [resolvable:$true] %s647
      %650 = dma.vmem_to_hbm [thread:$0]  %s648, 32, %s7, [#allocation3]
    $region33: #{cnn_forward.5} parent=1 // pred_fallthru
      _
    // Predicated region
    $region34: #{cnn_forward.5} parent=1 // pred_check
      _
    $region35: #{cnn_forward.5} parent=1 // pred_check_branch
      %652 = sbr.rel (0) target = $region37
    $region36: #{cnn_forward.5} parent=1 // pred_region
      %653 = dma.done [#allocation3], 32
    $region37: #{cnn_forward.5} parent=1 // pred_fallthru
      _
    %654 = vsyncpa [#allocation3], 1

</llo_original>
